<compile_context>
chip_gen: v5e
topology: v5e:2x2
jax: 0.10.0
libtpu: 0.0.40
codegen_flags: <defaults>
</compile_context>

<pallas_src>
import functools

import jax
import jax.numpy as jnp
from jax.experimental import pallas as pl
from jax.experimental.pallas import tpu as pltpu


def bottleneck_kernel(x_ref, w1_ref, b1_ref, w2_ref, b2_ref, w3_ref, b3_ref,
                      o_ref):
    B, H, W, Cin = x_ref.shape
    P = w1_ref.shape[1]
    Cout = w3_ref.shape[1]
    M = B * H * W

    x = x_ref[...]                                   # (B, H, W, Cin) bf16
    xf = x.reshape(M, Cin)

    # ---- conv1 (1x1) + bn1 + relu  (BN scale folded into w1) ----
    h1 = jnp.dot(xf, w1_ref[...], preferred_element_type=jnp.float32)
    h1 = jnp.maximum(h1 + b1_ref[...], 0.0)          # (M, P) f32
    h1_img = h1.reshape(B, H, W, P)

    # ---- conv2 (3x3, stride=1, pad=1) + bn2 + relu ----
    # Column neighbours via XLU roll.  The shift-sign convention of roll is
    # resolved at runtime by rolling an iota alongside the data and selecting
    # whichever rotated copy actually holds in[.., x-1] / in[.., x+1].
    col = jax.lax.broadcasted_iota(jnp.int32, (B, H, W, P), dimension=2)
    r_a = pltpu.roll(h1_img, shift=1, axis=2)
    r_b = pltpu.roll(h1_img, shift=W - 1, axis=2)
    c_a = pltpu.roll(col, shift=1, axis=2)           # source column of r_a
    left = jnp.where(c_a == col - 1, r_a, r_b)       # in[y, x-1]
    left = jnp.where(col == 0, 0.0, left)
    right = jnp.where(c_a == col + 1, r_a, r_b)      # in[y, x+1]
    right = jnp.where(col == W - 1, 0.0, right)

    # kx taps stacked on the lane axis -> one (M, 3P) operand per row shift.
    cat = jnp.concatenate([left, h1_img, right], axis=-1).astype(jnp.bfloat16)
    zrow = jnp.zeros((B, 1, W, 3 * P), jnp.bfloat16)
    rows_up = jnp.concatenate([zrow, cat[:, :H - 1]], axis=1)    # in[y-1, ..]
    rows_dn = jnp.concatenate([cat[:, 1:], zrow], axis=1)        # in[y+1, ..]

    acc = jnp.dot(rows_up.reshape(M, 3 * P), w2_ref[0],
                  preferred_element_type=jnp.float32)
    acc += jnp.dot(cat.reshape(M, 3 * P), w2_ref[1],
                   preferred_element_type=jnp.float32)
    acc += jnp.dot(rows_dn.reshape(M, 3 * P), w2_ref[2],
                   preferred_element_type=jnp.float32)
    h2 = jnp.maximum(acc + b2_ref[...], 0.0).astype(jnp.bfloat16)

    # ---- conv3 (1x1) + bn3 + residual add + relu ----
    h3 = jnp.dot(h2, w3_ref[...], preferred_element_type=jnp.float32)
    h3 = h3 + b3_ref[...] + xf.astype(jnp.float32)   # identity (Cin == Cout)
    out = jnp.maximum(h3, 0.0)

    o_ref[...] = out.reshape(B, H, W, Cout).astype(o_ref.dtype)


def _round_up(n, m):
    return ((n + m - 1) // m) * m


def _fold_bn(gamma, beta, mean, var, eps=1e-5):
    scale = gamma / jnp.sqrt(var + eps)
    bias = beta - mean * scale
    return scale.astype(jnp.float32), bias.astype(jnp.float32)


@functools.partial(jax.jit, static_argnames=("block_n",))
def bottleneck_forward(x_nchw, params, block_n=1):
    (w1, g1, be1, m1, v1,
     w2, g2, be2, m2, v2,
     w3, g3, be3, m3, v3) = params

    N, Cin, H, W = x_nchw.shape
    P = w1.shape[0]
    Cout = w3.shape[0]
    if Cin != Cout:
        raise ValueError("stride=1 / downsample=None requires "
                         "inplanes == planes * expansion")
    if N % block_n != 0:
        raise ValueError("batch must be divisible by block_n")

    LANE = 128
    Cin_p = _round_up(Cin, LANE)
    P_p = _round_up(P, LANE)
    Cout_p = _round_up(Cout, LANE)      # Cin == Cout  =>  Cin_p == Cout_p

    s1, b1 = _fold_bn(g1, be1, m1, v1)
    s2, b2 = _fold_bn(g2, be2, m2, v2)
    s3, b3 = _fold_bn(g3, be3, m3, v3)

    # Matmul-layout weights, BN scale folded per output channel, zero-padded to
    # lane multiples, cast to bf16 (accumulation stays f32 on the MXU).
    w1m = jnp.transpose(w1[:, :, 0, 0]) * s1[None, :]                # (Cin, P)
    w1m = jnp.pad(w1m, ((0, Cin_p - Cin), (0, P_p - P))).astype(jnp.bfloat16)

    w2m = jnp.transpose(w2, (2, 3, 1, 0)) * s2[None, None, None, :]  # (3,3,P,P)
    w2m = jnp.pad(w2m, ((0, 0), (0, 0), (0, P_p - P), (0, P_p - P)))
    w2m = w2m.reshape(3, 3 * P_p, P_p).astype(jnp.bfloat16)  # [ky, kx*P+ci, co]

    w3m = jnp.transpose(w3[:, :, 0, 0]) * s3[None, :]                # (P, Cout)
    w3m = jnp.pad(w3m, ((0, P_p - P), (0, Cout_p - Cout))).astype(jnp.bfloat16)

    b1p = jnp.pad(b1, (0, P_p - P)).reshape(1, P_p)
    b2p = jnp.pad(b2, (0, P_p - P)).reshape(1, P_p)
    b3p = jnp.pad(b3, (0, Cout_p - Cout)).reshape(1, Cout_p)

    # NCHW -> NHWC (channels on lanes), pad channels, bf16 MXU operands.
    # TODO(synk): if the surrounding model runs NHWC these transposes drop out.
    x = jnp.transpose(x_nchw, (0, 2, 3, 1))
    x = jnp.pad(x, ((0, 0), (0, 0), (0, 0), (0, Cin_p - Cin)))
    x = x.astype(jnp.bfloat16)

    def full_spec(shape):
        return pl.BlockSpec(shape, lambda n, _nd=len(shape): (0,) * _nd)

    flops = 2 * N * H * W * (Cin_p * P_p + 9 * P_p * P_p + P_p * Cout_p)
    bytes_accessed = (x.size * 2 + N * H * W * Cout_p * 4
                      + (w1m.size + w2m.size + w3m.size) * 2
                      + (b1p.size + b2p.size + b3p.size) * 4)
    cost = pl.CostEstimate(flops=flops, transcendentals=0,
                           bytes_accessed=bytes_accessed)

    out_nhwc = pl.pallas_call(
        bottleneck_kernel,
        out_shape=jax.ShapeDtypeStruct((N, H, W, Cout_p), jnp.float32),
        grid=(N // block_n,),
        in_specs=[
            pl.BlockSpec((block_n, H, W, Cin_p), lambda n: (n, 0, 0, 0)),
            full_spec(w1m.shape), full_spec(b1p.shape),
            full_spec(w2m.shape), full_spec(b2p.shape),
            full_spec(w3m.shape), full_spec(b3p.shape),
        ],
        out_specs=pl.BlockSpec((block_n, H, W, Cout_p), lambda n: (n, 0, 0, 0)),
        compiler_params=pltpu.CompilerParams(
            dimension_semantics=("parallel",)),
        cost_estimate=cost,
    )(x, w1m, b1p, w2m, b2p, w3m, b3p)

    out = out_nhwc[..., :Cout]                       # drop padded channels
    return jnp.transpose(out, (0, 3, 1, 2)).astype(x_nchw.dtype)


def reference_forward(x, params, eps=1e-5):
    """Plain-JAX (XLA) reference of the PyTorch Bottleneck.forward (eval-mode BN)."""
    (w1, g1, be1, m1, v1,
     w2, g2, be2, m2, v2,
     w3, g3, be3, m3, v3) = params
    dn = ('NCHW', 'OIHW', 'NCHW')

    def bn(h, g, b, m, v):
        g, b, m, v = (t[None, :, None, None] for t in (g, b, m, v))
        return (h - m) / jnp.sqrt(v + eps) * g + b

    conv = functools.partial(jax.lax.conv_general_dilated,
                             dimension_numbers=dn,
                             precision=jax.lax.Precision.HIGHEST)
    out = jax.nn.relu(bn(conv(x, w1, (1, 1), 'VALID'), g1, be1, m1, v1))
    out = jax.nn.relu(bn(conv(out, w2, (1, 1), ((1, 1), (1, 1))), g2, be2, m2, v2))
    out = bn(conv(out, w3, (1, 1), 'VALID'), g3, be3, m3, v3)
    return jax.nn.relu(out + x)


def init_params(key, inplanes, planes):
    expansion = 4
    ks = jax.random.split(key, 16)

    def conv_w(k, co, ci, kh, kw):
        return 0.1 * jax.random.normal(k, (co, ci, kh, kw), jnp.float32)

    def bn_p(k, c):
        k1, k2, k3, k4 = jax.random.split(k, 4)
        gamma = jax.random.uniform(k1, (c,), jnp.float32, 0.5, 1.5)
        beta = 0.1 * jax.random.normal(k2, (c,), jnp.float32)
        mean = 0.1 * jax.random.normal(k3, (c,), jnp.float32)
        var = jax.random.uniform(k4, (c,), jnp.float32, 0.5, 1.5)
        return gamma, beta, mean, var

    w1 = conv_w(ks[0], planes, inplanes, 1, 1)
    g1, be1, m1, v1 = bn_p(ks[1], planes)
    w2 = conv_w(ks[2], planes, planes, 3, 3)
    g2, be2, m2, v2 = bn_p(ks[3], planes)
    w3 = conv_w(ks[4], planes * expansion, planes, 1, 1)
    g3, be3, m3, v3 = bn_p(ks[5], planes * expansion)
    return (w1, g1, be1, m1, v1,
            w2, g2, be2, m2, v2,
            w3, g3, be3, m3, v3)


if __name__ == "__main__":
    key = jax.random.PRNGKey(0)
    k_x, k_p = jax.random.split(key)

    planes = 32
    inplanes = planes * 4          # downsample=None requires inplanes == planes*4
    N, H, W = 2, 16, 16

    x = jax.random.normal(k_x, (N, inplanes, H, W), jnp.float32)
    params = init_params(k_p, inplanes, planes)

    out = jax.block_until_ready(bottleneck_forward(x, params))
    ref = jax.block_until_ready(reference_forward(x, params))

    assert out.shape == ref.shape == (N, planes * 4, H, W)
    max_err = float(jnp.max(jnp.abs(out - ref)))
    # bf16 MXU operands with f32 accumulation -> deliberately wider tolerance
    # than the f32 HIGHEST-precision reference.
    assert jnp.allclose(out, ref, rtol=5e-2, atol=5e-2), (
        f"max abs err = {max_err}")
    print("KERNEL_OK")
</pallas_src>

<mosaic_0001>
module attributes {stable_mosaic.version = 11 : i64} {
  func.func @bottleneck_kernel(%arg0: i32, %arg1: memref<1x16x16x128xbf16, #tpu.memory_space<vmem>>, %arg2: memref<128x128xbf16, #tpu.memory_space<vmem>>, %arg3: memref<1x128xf32, #tpu.memory_space<vmem>>, %arg4: memref<3x384x128xbf16, #tpu.memory_space<vmem>>, %arg5: memref<1x128xf32, #tpu.memory_space<vmem>>, %arg6: memref<128x128xbf16, #tpu.memory_space<vmem>>, %arg7: memref<1x128xf32, #tpu.memory_space<vmem>>, %arg8: memref<1x16x16x128xf32, #tpu.memory_space<vmem>>) attributes {dimension_semantics = [#tpu.dimension_semantics<parallel>], iteration_bounds = array<i64: 2>, scalar_prefetch = 0 : i64, scratch_operands = 0 : i64, tpu.core_type = #tpu.core_type<tc>, window_params = [{transform_indices = @transform_0, window_bounds = array<i64: 1, 16, 16, 128>}, {pipeline_mode = #tpu.pipeline_mode<synchronous>, transform_indices = @transform_1, window_bounds = array<i64: 128, 128>}, {pipeline_mode = #tpu.pipeline_mode<synchronous>, transform_indices = @transform_2, window_bounds = array<i64: 1, 128>}, {pipeline_mode = #tpu.pipeline_mode<synchronous>, transform_indices = @transform_3, window_bounds = array<i64: 3, 384, 128>}, {pipeline_mode = #tpu.pipeline_mode<synchronous>, transform_indices = @transform_4, window_bounds = array<i64: 1, 128>}, {pipeline_mode = #tpu.pipeline_mode<synchronous>, transform_indices = @transform_5, window_bounds = array<i64: 128, 128>}, {pipeline_mode = #tpu.pipeline_mode<synchronous>, transform_indices = @transform_6, window_bounds = array<i64: 1, 128>}, {transform_indices = @transform_7, window_bounds = array<i64: 1, 16, 16, 128>}]} {
    %c0 = arith.constant 0 : index
    %c0_0 = arith.constant 0 : index
    %c0_1 = arith.constant 0 : index
    %c0_2 = arith.constant 0 : index
    %0 = vector.load %arg1[%c0, %c0_0, %c0_1, %c0_2] : memref<1x16x16x128xbf16, #tpu.memory_space<vmem>>, vector<1x16x16x128xbf16>
    %1 = vector.shape_cast %0 : vector<1x16x16x128xbf16> to vector<256x128xbf16>
    %c0_3 = arith.constant 0 : index
    %c0_4 = arith.constant 0 : index
    %2 = vector.load %arg2[%c0_3, %c0_4] : memref<128x128xbf16, #tpu.memory_space<vmem>>, vector<128x128xbf16>
    %cst = arith.constant dense<0.000000e+00> : vector<256x128xf32>
    %3 = tpu.matmul %1, %2, %cst {dimension_numbers = #tpu.dot_dimension_numbers<[1], [0], [0], [1], [0, 0, 1, 1], [], []>} : vector<256x128xbf16>, vector<128x128xbf16>, vector<256x128xf32> -> vector<256x128xf32>
    %c0_5 = arith.constant 0 : index
    %c0_6 = arith.constant 0 : index
    %4 = vector.load %arg3[%c0_5, %c0_6] : memref<1x128xf32, #tpu.memory_space<vmem>>, vector<1x128xf32>
    %5 = vector.broadcast %4 : vector<1x128xf32> to vector<256x128xf32>
    %6 = arith.addf %3, %5 : vector<256x128xf32>
    %cst_7 = arith.constant 0.000000e+00 : f32
    %7 = vector.broadcast %cst_7 : f32 to vector<256x128xf32>
    %8 = arith.maximumf %6, %7 : vector<256x128xf32>
    %9 = vector.shape_cast %8 : vector<256x128xf32> to vector<1x16x16x128xf32>
    %10 = tpu.iota {dimensions = array<i32: 2>} : vector<1x16x16x128xi32>
    %c1_i32 = arith.constant 1 : i32
    %11 = tpu.dynamic_rotate %9 by %c1_i32 dim 2 : vector<1x16x16x128xf32>, i32 -> vector<1x16x16x128xf32>
    %c15_i32 = arith.constant 15 : i32
    %12 = tpu.dynamic_rotate %9 by %c15_i32 dim 2 : vector<1x16x16x128xf32>, i32 -> vector<1x16x16x128xf32>
    %c1_i32_8 = arith.constant 1 : i32
    %13 = tpu.dynamic_rotate %10 by %c1_i32_8 dim 2 : vector<1x16x16x128xi32>, i32 -> vector<1x16x16x128xi32>
    %c1_i32_9 = arith.constant 1 : i32
    %14 = vector.broadcast %c1_i32_9 : i32 to vector<1x16x16x128xi32>
    %15 = arith.subi %10, %14 : vector<1x16x16x128xi32>
    %16 = arith.cmpi eq, %13, %15 : vector<1x16x16x128xi32>
    %17 = arith.select %16, %11, %12 : vector<1x16x16x128xi1>, vector<1x16x16x128xf32>
    %c0_i32 = arith.constant 0 : i32
    %18 = vector.broadcast %c0_i32 : i32 to vector<1x16x16x128xi32>
    %19 = arith.cmpi eq, %10, %18 : vector<1x16x16x128xi32>
    %cst_10 = arith.constant 0.000000e+00 : f32
    %20 = vector.broadcast %cst_10 : f32 to vector<1x16x16x128xf32>
    %21 = arith.select %19, %20, %17 : vector<1x16x16x128xi1>, vector<1x16x16x128xf32>
    %c1_i32_11 = arith.constant 1 : i32
    %22 = vector.broadcast %c1_i32_11 : i32 to vector<1x16x16x128xi32>
    %23 = arith.addi %10, %22 : vector<1x16x16x128xi32>
    %24 = arith.cmpi eq, %13, %23 : vector<1x16x16x128xi32>
    %25 = arith.select %24, %11, %12 : vector<1x16x16x128xi1>, vector<1x16x16x128xf32>
    %c15_i32_12 = arith.constant 15 : i32
    %26 = vector.broadcast %c15_i32_12 : i32 to vector<1x16x16x128xi32>
    %27 = arith.cmpi eq, %10, %26 : vector<1x16x16x128xi32>
    %cst_13 = arith.constant 0.000000e+00 : f32
    %28 = vector.broadcast %cst_13 : f32 to vector<1x16x16x128xf32>
    %29 = arith.select %27, %28, %25 : vector<1x16x16x128xi1>, vector<1x16x16x128xf32>
    %30 = tpu.concatenate %21, %9, %29 in 3 : vector<1x16x16x128xf32>, vector<1x16x16x128xf32>, vector<1x16x16x128xf32> -> vector<1x16x16x384xf32>
    %31 = arith.truncf %30 : vector<1x16x16x384xf32> to vector<1x16x16x384xbf16>
    %cst_14 = arith.constant 0.000000e+00 : bf16
    %32 = vector.broadcast %cst_14 : bf16 to vector<1x1x16x384xbf16>
    %33 = vector.extract_strided_slice %31 {offsets = [0, 0, 0, 0], sizes = [1, 15, 16, 384], strides = [1, 1, 1, 1]} : vector<1x16x16x384xbf16> to vector<1x15x16x384xbf16>
    %34 = tpu.concatenate %32, %33 in 1 : vector<1x1x16x384xbf16>, vector<1x15x16x384xbf16> -> vector<1x16x16x384xbf16>
    %35 = vector.extract_strided_slice %31 {offsets = [0, 1, 0, 0], sizes = [1, 15, 16, 384], strides = [1, 1, 1, 1]} : vector<1x16x16x384xbf16> to vector<1x15x16x384xbf16>
    %36 = tpu.concatenate %35, %32 in 1 : vector<1x15x16x384xbf16>, vector<1x1x16x384xbf16> -> vector<1x16x16x384xbf16>
    %37 = vector.shape_cast %34 : vector<1x16x16x384xbf16> to vector<256x384xbf16>
    %c0_15 = arith.constant 0 : index
    %c0_16 = arith.constant 0 : index
    %c0_17 = arith.constant 0 : index
    %38 = vector.load %arg4[%c0_15, %c0_16, %c0_17] : memref<3x384x128xbf16, #tpu.memory_space<vmem>>, vector<1x384x128xbf16>
    %39 = vector.shape_cast %38 : vector<1x384x128xbf16> to vector<384x128xbf16>
    %cst_18 = arith.constant dense<0.000000e+00> : vector<256x128xf32>
    %40 = tpu.matmul %37, %39, %cst_18 {dimension_numbers = #tpu.dot_dimension_numbers<[1], [0], [0], [1], [0, 0, 1, 1], [], []>} : vector<256x384xbf16>, vector<384x128xbf16>, vector<256x128xf32> -> vector<256x128xf32>
    %41 = vector.shape_cast %31 : vector<1x16x16x384xbf16> to vector<256x384xbf16>
    %c1 = arith.constant 1 : index
    %c0_19 = arith.constant 0 : index
    %c0_20 = arith.constant 0 : index
    %42 = vector.load %arg4[%c1, %c0_19, %c0_20] : memref<3x384x128xbf16, #tpu.memory_space<vmem>>, vector<1x384x128xbf16>
    %43 = vector.shape_cast %42 : vector<1x384x128xbf16> to vector<384x128xbf16>
    %cst_21 = arith.constant dense<0.000000e+00> : vector<256x128xf32>
    %44 = tpu.matmul %41, %43, %cst_21 {dimension_numbers = #tpu.dot_dimension_numbers<[1], [0], [0], [1], [0, 0, 1, 1], [], []>} : vector<256x384xbf16>, vector<384x128xbf16>, vector<256x128xf32> -> vector<256x128xf32>
    %45 = arith.addf %40, %44 : vector<256x128xf32>
    %46 = vector.shape_cast %36 : vector<1x16x16x384xbf16> to vector<256x384xbf16>
    %c2 = arith.constant 2 : index
    %c0_22 = arith.constant 0 : index
    %c0_23 = arith.constant 0 : index
    %47 = vector.load %arg4[%c2, %c0_22, %c0_23] : memref<3x384x128xbf16, #tpu.memory_space<vmem>>, vector<1x384x128xbf16>
    %48 = vector.shape_cast %47 : vector<1x384x128xbf16> to vector<384x128xbf16>
    %cst_24 = arith.constant dense<0.000000e+00> : vector<256x128xf32>
    %49 = tpu.matmul %46, %48, %cst_24 {dimension_numbers = #tpu.dot_dimension_numbers<[1], [0], [0], [1], [0, 0, 1, 1], [], []>} : vector<256x384xbf16>, vector<384x128xbf16>, vector<256x128xf32> -> vector<256x128xf32>
    %50 = arith.addf %45, %49 : vector<256x128xf32>
    %c0_25 = arith.constant 0 : index
    %c0_26 = arith.constant 0 : index
    %51 = vector.load %arg5[%c0_25, %c0_26] : memref<1x128xf32, #tpu.memory_space<vmem>>, vector<1x128xf32>
    %52 = vector.broadcast %51 : vector<1x128xf32> to vector<256x128xf32>
    %53 = arith.addf %50, %52 : vector<256x128xf32>
    %cst_27 = arith.constant 0.000000e+00 : f32
    %54 = vector.broadcast %cst_27 : f32 to vector<256x128xf32>
    %55 = arith.maximumf %53, %54 : vector<256x128xf32>
    %56 = arith.truncf %55 : vector<256x128xf32> to vector<256x128xbf16>
    %c0_28 = arith.constant 0 : index
    %c0_29 = arith.constant 0 : index
    %57 = vector.load %arg6[%c0_28, %c0_29] : memref<128x128xbf16, #tpu.memory_space<vmem>>, vector<128x128xbf16>
    %cst_30 = arith.constant dense<0.000000e+00> : vector<256x128xf32>
    %58 = tpu.matmul %56, %57, %cst_30 {dimension_numbers = #tpu.dot_dimension_numbers<[1], [0], [0], [1], [0, 0, 1, 1], [], []>} : vector<256x128xbf16>, vector<128x128xbf16>, vector<256x128xf32> -> vector<256x128xf32>
    %c0_31 = arith.constant 0 : index
    %c0_32 = arith.constant 0 : index
    %59 = vector.load %arg7[%c0_31, %c0_32] : memref<1x128xf32, #tpu.memory_space<vmem>>, vector<1x128xf32>
    %60 = vector.broadcast %59 : vector<1x128xf32> to vector<256x128xf32>
    %61 = arith.addf %58, %60 : vector<256x128xf32>
    %62 = arith.extf %1 : vector<256x128xbf16> to vector<256x128xf32>
    %63 = arith.addf %61, %62 : vector<256x128xf32>
    %cst_33 = arith.constant 0.000000e+00 : f32
    %64 = vector.broadcast %cst_33 : f32 to vector<256x128xf32>
    %65 = arith.maximumf %63, %64 : vector<256x128xf32>
    %66 = vector.shape_cast %65 : vector<256x128xf32> to vector<1x16x16x128xf32>
    %c0_34 = arith.constant 0 : index
    %c0_35 = arith.constant 0 : index
    %c0_36 = arith.constant 0 : index
    %c0_37 = arith.constant 0 : index
    %67 = vector.load %arg8[%c0_34, %c0_35, %c0_36, %c0_37] : memref<1x16x16x128xf32, #tpu.memory_space<vmem>>, vector<1x16x16x128xf32>
    tpu.vector_store %arg8[%c0_34, %c0_35, %c0_36, %c0_37], %66 {strides = array<i32>} : memref<1x16x16x128xf32, #tpu.memory_space<vmem>>, vector<1x16x16x128xf32>,
    return
  }
  func.func @transform_0(%arg0: i32) -> (i32, i32, i32, i32) {
    %c0_i32 = arith.constant 0 : i32
    %c0_i32_0 = arith.constant 0 : i32
    %c0_i32_1 = arith.constant 0 : i32
    %c0_i32_2 = arith.constant 0 : i32
    return %arg0, %c0_i32, %c0_i32_0, %c0_i32_1 : i32, i32, i32, i32
  }
  func.func @transform_1(%arg0: i32) -> (i32, i32) {
    %c0_i32 = arith.constant 0 : i32
    %c0_i32_0 = arith.constant 0 : i32
    %c0_i32_1 = arith.constant 0 : i32
    return %c0_i32, %c0_i32_0 : i32, i32
  }
  func.func @transform_2(%arg0: i32) -> (i32, i32) {
    %c0_i32 = arith.constant 0 : i32
    %c0_i32_0 = arith.constant 0 : i32
    %c0_i32_1 = arith.constant 0 : i32
    return %c0_i32, %c0_i32_0 : i32, i32
  }
  func.func @transform_3(%arg0: i32) -> (i32, i32, i32) {
    %c0_i32 = arith.constant 0 : i32
    %c0_i32_0 = arith.constant 0 : i32
    %c0_i32_1 = arith.constant 0 : i32
    %c0_i32_2 = arith.constant 0 : i32
    return %c0_i32, %c0_i32_0, %c0_i32_1 : i32, i32, i32
  }
  func.func @transform_4(%arg0: i32) -> (i32, i32) {
    %c0_i32 = arith.constant 0 : i32
    %c0_i32_0 = arith.constant 0 : i32
    %c0_i32_1 = arith.constant 0 : i32
    return %c0_i32, %c0_i32_0 : i32, i32
  }
  func.func @transform_5(%arg0: i32) -> (i32, i32) {
    %c0_i32 = arith.constant 0 : i32
    %c0_i32_0 = arith.constant 0 : i32
    %c0_i32_1 = arith.constant 0 : i32
    return %c0_i32, %c0_i32_0 : i32, i32
  }
  func.func @transform_6(%arg0: i32) -> (i32, i32) {
    %c0_i32 = arith.constant 0 : i32
    %c0_i32_0 = arith.constant 0 : i32
    %c0_i32_1 = arith.constant 0 : i32
    return %c0_i32, %c0_i32_0 : i32, i32
  }
  func.func @transform_7(%arg0: i32) -> (i32, i32, i32, i32) {
    %c0_i32 = arith.constant 0 : i32
    %c0_i32_0 = arith.constant 0 : i32
    %c0_i32_1 = arith.constant 0 : i32
    %c0_i32_2 = arith.constant 0 : i32
    return %arg0, %c0_i32, %c0_i32_0, %c0_i32_1 : i32, i32, i32, i32
  }
}

</mosaic_0001>

<llo_original>
// kernel: bottleneck_forward.1
$region0: #{bottleneck_forward.1}
  #allocation0 [shape = 'u32[]', space=smem, size = 0x4, offset = 0x4, fixed_abs, tag = 'smem constant byte address 0x4 - core index']
  #allocation1 [shape = 'u32[72,128]{1,0:T(1,128)}', space=vmem, size = 0x9000, scoped, tag = 'internal scratch']
  %s0 = inlined_call_operand.vmem [shape: bf16[2,16,16,128], index: 0, kind: input, shape index: {}]
  %s1 = inlined_call_operand.vmem [shape: bf16[128,128], index: 1, kind: input, shape index: {}]
  %s2 = inlined_call_operand.vmem [shape: f32[1,128], index: 2, kind: input, shape index: {}]
  %s3 = inlined_call_operand.vmem [shape: bf16[3,384,128], index: 3, kind: input, shape index: {}]
  %s4 = inlined_call_operand.vmem [shape: f32[1,128], index: 4, kind: input, shape index: {}]
  %s5 = inlined_call_operand.vmem [shape: bf16[128,128], index: 5, kind: input, shape index: {}]
  %s6 = inlined_call_operand.vmem [shape: f32[1,128], index: 6, kind: input, shape index: {}]
  %s7 = inlined_call_operand.hbm [shape: f32[2,16,16,128], index: 7, kind: output, shape index: {}]
  %s8 = sld [smem:[#allocation0]]
  $region61: #{bottleneck_forward.1} parent=0
    _
  %s10 = ssub.s32 1, %s8
  %s11 = scalar_select 0, %s10, %s8
  $region1: #{bottleneck_forward.1} parent=0
    #allocation2 [shape = 'u8[262144]{0}', space=vmem, size = 0x40000, scoped, tag = 'output window, operand 0']
    #allocation3 [shape = 's32[2]{0}', space=sflag, size = 0x8, scoped, tag = 'scoped memory for bottleneck_forward.1']
    %12 = vsyncpa [#allocation3], 0
    %s13 = scalar_lea.sflag [#allocation3], 1
    %14 = vsyncpa %s13, 0
    loop: start=0, step=1, limit=4
    $region2: #{bottleneck_forward.1} parent=1 // loop_pre_header
      _
    $region3: #{bottleneck_forward.1} parent=1 // loop_header
      %s16 = sphi 0, %s20
      %p17 = scmp.ge.s32.totalorder %s16, 4
      %s26 = sphi 0, %s28
      %s29 = sphi 0, %s26
      %s30 = sphi 0, %s29
      %s46 = sphi 0, %s30
      %s50 = sphi 0, %s50
      %s52 = sphi 0, %s50
      %s53 = sphi 0, %s52
      %s67 = sphi 0, %s53
      %s71 = sphi 0, %s71
      %s73 = sphi 0, %s71
      %s74 = sphi 0, %s73
      %s88 = sphi 0, %s74
      %s92 = sphi 0, %s92
      %s94 = sphi 0, %s92
      %s95 = sphi 0, %s94
      %s109 = sphi 0, %s95
      %s113 = sphi 0, %s113
      %s115 = sphi 0, %s113
      %s116 = sphi 0, %s115
      %s130 = sphi 0, %s116
      %s134 = sphi 0, %s134
      %s136 = sphi 0, %s134
      %s137 = sphi 0, %s136
      %s151 = sphi 0, %s137
      %s155 = sphi 0, %s155
      %s157 = sphi 0, %s155
      %s158 = sphi 0, %s157
      %s172 = sphi 0, %s158
      %s178 = sphi 0, %s180
      %s181 = sphi 0, %s178
      %s182 = sphi 0, %s181
      %s198 = sphi 0, %s182
    $region4: #{bottleneck_forward.1} parent=1 // loop_header_branch
      %19 = sbr.rel (%p17) target = $region8
    $region5: #{bottleneck_forward.1} parent=1 // loop_body
      %s21 = ssub.s32 %s16, 1
      %s22 = ssub.s32 %s16, 2
      %s23 = sadd.s32 %s16, 1
      %s24 = ssub.s32 %s16, %s23
      %p25 = scmp.eq.s32.totalorder %s24, 0
      %s27 = sadd.s32 %s26, 1
      %s28 = scalar_select %p25, %s26, %s27
      %p31 = pneg %p25
      %p32 = scmp.eq.s32.totalorder %s16, 1
      %p33 = por %p31, %p32
      %p34 = scmp.ne.s32.totalorder %s26, %s29
      %p35 = scmp.eq.s32.totalorder %s16, 0
      %p36 = por %p34, %p35
      %p37 = scmp.ne.s32.totalorder %s26, %s29
      %p38 = scmp.eq.s32.totalorder %s21, 1
      %p39 = por %p37, %p38
      %p40 = scmp.ne.s32.totalorder %s29, %s30
      %p41 = scmp.eq.s32.totalorder %s21, 0
      %p42 = por %p40, %p41
      %p43 = scmp.ne.s32.totalorder %s29, %s30
      %p44 = scmp.eq.s32.totalorder %s22, 1
      %p45 = por %p43, %p44
      %p47 = scmp.ne.s32.totalorder %s30, %s46
      %p48 = scmp.eq.s32.totalorder %s22, 0
      %p49 = por %p47, %p48
      %s51 = sadd.s32 %s50, 1
      %p54 = scmp.eq.s32.totalorder %s16, 1
      %p55 = scmp.ne.s32.totalorder %s50, %s52
      %p56 = scmp.eq.s32.totalorder %s16, 0
      %p57 = por %p55, %p56
      %p58 = scmp.ne.s32.totalorder %s50, %s52
      %p59 = scmp.eq.s32.totalorder %s21, 1
      %p60 = por %p58, %p59
      %p61 = scmp.ne.s32.totalorder %s52, %s53
      %p62 = scmp.eq.s32.totalorder %s21, 0
      %p63 = por %p61, %p62
      %p64 = scmp.ne.s32.totalorder %s52, %s53
      %p65 = scmp.eq.s32.totalorder %s22, 1
      %p66 = por %p64, %p65
      %p68 = scmp.ne.s32.totalorder %s53, %s67
      %p69 = scmp.eq.s32.totalorder %s22, 0
      %p70 = por %p68, %p69
      %s72 = sadd.s32 %s71, 1
      %p75 = scmp.eq.s32.totalorder %s16, 1
      %p76 = scmp.ne.s32.totalorder %s71, %s73
      %p77 = scmp.eq.s32.totalorder %s16, 0
      %p78 = por %p76, %p77
      %p79 = scmp.ne.s32.totalorder %s71, %s73
      %p80 = scmp.eq.s32.totalorder %s21, 1
      %p81 = por %p79, %p80
      %p82 = scmp.ne.s32.totalorder %s73, %s74
      %p83 = scmp.eq.s32.totalorder %s21, 0
      %p84 = por %p82, %p83
      %p85 = scmp.ne.s32.totalorder %s73, %s74
      %p86 = scmp.eq.s32.totalorder %s22, 1
      %p87 = por %p85, %p86
      %p89 = scmp.ne.s32.totalorder %s74, %s88
      %p90 = scmp.eq.s32.totalorder %s22, 0
      %p91 = por %p89, %p90
      %s93 = sadd.s32 %s92, 1
      %p96 = scmp.eq.s32.totalorder %s16, 1
      %p97 = scmp.ne.s32.totalorder %s92, %s94
      %p98 = scmp.eq.s32.totalorder %s16, 0
      %p99 = por %p97, %p98
      %p100 = scmp.ne.s32.totalorder %s92, %s94
      %p101 = scmp.eq.s32.totalorder %s21, 1
      %p102 = por %p100, %p101
      %p103 = scmp.ne.s32.totalorder %s94, %s95
      %p104 = scmp.eq.s32.totalorder %s21, 0
      %p105 = por %p103, %p104
      %p106 = scmp.ne.s32.totalorder %s94, %s95
      %p107 = scmp.eq.s32.totalorder %s22, 1
      %p108 = por %p106, %p107
      %p110 = scmp.ne.s32.totalorder %s95, %s109
      %p111 = scmp.eq.s32.totalorder %s22, 0
      %p112 = por %p110, %p111
      %s114 = sadd.s32 %s113, 1
      %p117 = scmp.eq.s32.totalorder %s16, 1
      %p118 = scmp.ne.s32.totalorder %s113, %s115
      %p119 = scmp.eq.s32.totalorder %s16, 0
      %p120 = por %p118, %p119
      %p121 = scmp.ne.s32.totalorder %s113, %s115
      %p122 = scmp.eq.s32.totalorder %s21, 1
      %p123 = por %p121, %p122
      %p124 = scmp.ne.s32.totalorder %s115, %s116
      %p125 = scmp.eq.s32.totalorder %s21, 0
      %p126 = por %p124, %p125
      %p127 = scmp.ne.s32.totalorder %s115, %s116
      %p128 = scmp.eq.s32.totalorder %s22, 1
      %p129 = por %p127, %p128
      %p131 = scmp.ne.s32.totalorder %s116, %s130
      %p132 = scmp.eq.s32.totalorder %s22, 0
      %p133 = por %p131, %p132
      %s135 = sadd.s32 %s134, 1
      %p138 = scmp.eq.s32.totalorder %s16, 1
      %p139 = scmp.ne.s32.totalorder %s134, %s136
      %p140 = scmp.eq.s32.totalorder %s16, 0
      %p141 = por %p139, %p140
      %p142 = scmp.ne.s32.totalorder %s134, %s136
      %p143 = scmp.eq.s32.totalorder %s21, 1
      %p144 = por %p142, %p143
      %p145 = scmp.ne.s32.totalorder %s136, %s137
      %p146 = scmp.eq.s32.totalorder %s21, 0
      %p147 = por %p145, %p146
      %p148 = scmp.ne.s32.totalorder %s136, %s137
      %p149 = scmp.eq.s32.totalorder %s22, 1
      %p150 = por %p148, %p149
      %p152 = scmp.ne.s32.totalorder %s137, %s151
      %p153 = scmp.eq.s32.totalorder %s22, 0
      %p154 = por %p152, %p153
      %s156 = sadd.s32 %s155, 1
      %p159 = scmp.eq.s32.totalorder %s16, 1
      %p160 = scmp.ne.s32.totalorder %s155, %s157
      %p161 = scmp.eq.s32.totalorder %s16, 0
      %p162 = por %p160, %p161
      %p163 = scmp.ne.s32.totalorder %s155, %s157
      %p164 = scmp.eq.s32.totalorder %s21, 1
      %p165 = por %p163, %p164
      %p166 = scmp.ne.s32.totalorder %s157, %s158
      %p167 = scmp.eq.s32.totalorder %s21, 0
      %p168 = por %p166, %p167
      %p169 = scmp.ne.s32.totalorder %s157, %s158
      %p170 = scmp.eq.s32.totalorder %s22, 1
      %p171 = por %p169, %p170
      %p173 = scmp.ne.s32.totalorder %s158, %s172
      %p174 = scmp.eq.s32.totalorder %s22, 0
      %p175 = por %p173, %p174
      %s176 = ssub.s32 %s16, %s23
      %p177 = scmp.eq.s32.totalorder %s176, 0
      %s179 = sadd.s32 %s178, 1
      %s180 = scalar_select %p177, %s178, %s179
      %p183 = pneg %p177
      %p184 = scmp.eq.s32.totalorder %s16, 1
      %p185 = por %p183, %p184
      %p186 = scmp.ne.s32.totalorder %s178, %s181
      %p187 = scmp.eq.s32.totalorder %s16, 0
      %p188 = por %p186, %p187
      %p189 = scmp.ne.s32.totalorder %s178, %s181
      %p190 = scmp.eq.s32.totalorder %s21, 1
      %p191 = por %p189, %p190
      %p192 = scmp.ne.s32.totalorder %s181, %s182
      %p193 = scmp.eq.s32.totalorder %s21, 0
      %p194 = por %p192, %p193
      %p195 = scmp.ne.s32.totalorder %s181, %s182
      %p196 = scmp.eq.s32.totalorder %s22, 1
      %p197 = por %p195, %p196
      %p199 = scmp.ne.s32.totalorder %s182, %s198
      %p200 = scmp.eq.s32.totalorder %s22, 0
      %p201 = por %p199, %p200
      %p202 = scmp.le.s32.totalorder 1, %s16
      %p203 = scmp.lt.s32.totalorder %s16, 3
      %p204 = pnand %p202, %p203
      %p205 = pneg %p204
      // Predicated region
      $region9: #{bottleneck_forward.1} parent=5 // pred_check
        _
      $region10: #{bottleneck_forward.1} parent=5 // pred_check_branch
        %207 = sbr.rel (%p204) target = $region12
      $region11: #{bottleneck_forward.1} parent=5 // pred_region
        %s208 = ssub.s32 %s16, 1
        // Predicated region
        $region13: #{bottleneck_forward.1} parent=11 // pred_check
          %p209 = pneg %p63
        $region14: #{bottleneck_forward.1} parent=11 // pred_check_branch
          %211 = sbr.rel (%p209) target = $region16
        $region15: #{bottleneck_forward.1} parent=11 // pred_region
          _
        $region16: #{bottleneck_forward.1} parent=11 // pred_fallthru
          _
        // Predicated region
        $region17: #{bottleneck_forward.1} parent=11 // pred_check
          %p212 = pneg %p84
        $region18: #{bottleneck_forward.1} parent=11 // pred_check_branch
          %214 = sbr.rel (%p212) target = $region20
        $region19: #{bottleneck_forward.1} parent=11 // pred_region
          _
        $region20: #{bottleneck_forward.1} parent=11 // pred_fallthru
          _
        // Predicated region
        $region21: #{bottleneck_forward.1} parent=11 // pred_check
          %p215 = pneg %p105
        $region22: #{bottleneck_forward.1} parent=11 // pred_check_branch
          %217 = sbr.rel (%p215) target = $region24
        $region23: #{bottleneck_forward.1} parent=11 // pred_region
          _
        $region24: #{bottleneck_forward.1} parent=11 // pred_fallthru
          _
        // Predicated region
        $region25: #{bottleneck_forward.1} parent=11 // pred_check
          %p218 = pneg %p126
        $region26: #{bottleneck_forward.1} parent=11 // pred_check_branch
          %220 = sbr.rel (%p218) target = $region28
        $region27: #{bottleneck_forward.1} parent=11 // pred_region
          _
        $region28: #{bottleneck_forward.1} parent=11 // pred_fallthru
          _
        // Predicated region
        $region29: #{bottleneck_forward.1} parent=11 // pred_check
          %p221 = pneg %p147
        $region30: #{bottleneck_forward.1} parent=11 // pred_check_branch
          %223 = sbr.rel (%p221) target = $region32
        $region31: #{bottleneck_forward.1} parent=11 // pred_region
          _
        $region32: #{bottleneck_forward.1} parent=11 // pred_fallthru
          _
        // Predicated region
        $region33: #{bottleneck_forward.1} parent=11 // pred_check
          %p224 = pneg %p168
        $region34: #{bottleneck_forward.1} parent=11 // pred_check_branch
          %226 = sbr.rel (%p224) target = $region36
        $region35: #{bottleneck_forward.1} parent=11 // pred_region
          _
        $region36: #{bottleneck_forward.1} parent=11 // pred_fallthru
          _
      $region12: #{bottleneck_forward.1} parent=5 // pred_fallthru
        _
      %p227 = scmp.lt.s32.totalorder %s16, 2
      // Predicated region
      $region37: #{bottleneck_forward.1} parent=5 // pred_check
        %p228 = pneg %p227
      $region38: #{bottleneck_forward.1} parent=5 // pred_check_branch
        %230 = sbr.rel (%p228) target = $region40
      $region39: #{bottleneck_forward.1} parent=5 // pred_region
        // Predicated region
        $region41: #{bottleneck_forward.1} parent=39 // pred_check
          %p231 = pneg %p36
        $region42: #{bottleneck_forward.1} parent=39 // pred_check_branch
          %233 = sbr.rel (%p231) target = $region44
        $region43: #{bottleneck_forward.1} parent=39 // pred_region
          %p234 = scmp.lt.s32.totalorder %s16, 1
          %s235 = scalar_select %p234, %s16, 1
          %s236 = smul.addr %s235, 32
          %s237 = smul.addr %s236, 4
          %s238 = scalar_lea.vmem %s0, %s237
        $region44: #{bottleneck_forward.1} parent=39 // pred_fallthru
          _
      $region40: #{bottleneck_forward.1} parent=5 // pred_fallthru
        _
      %p239 = scmp.le.s32.totalorder 1, %s16
      %p240 = scmp.lt.s32.totalorder %s16, 3
      %p241 = pnand %p239, %p240
      %p242 = pneg %p241
      // Predicated region
      $region45: #{bottleneck_forward.1} parent=5 // pred_check
        _
      $region46: #{bottleneck_forward.1} parent=5 // pred_check_branch
        %244 = sbr.rel (%p241) target = $region48
      $region47: #{bottleneck_forward.1} parent=5 // pred_region
        %s245 = ssub.s32 %s16, 1
        %p246 = scmp.lt.s32.totalorder %s21, 1
        %s247 = scalar_select %p246, %s21, 1
        %s248 = smul.addr %s247, 32
        %s249 = smul.addr %s248, 4
        %s250 = scalar_lea.vmem %s0, %s249
        %p251 = pneg %p42
        %p252 = pneg %p39
        %p253 = pneg %p63
        %p254 = pneg %p60
        %p255 = pneg %p84
        %p256 = pneg %p81
        %p257 = pneg %p105
        %p258 = pneg %p102
        %p259 = pneg %p126
        %p260 = pneg %p123
        %p261 = pneg %p147
        %p262 = pneg %p144
        %p263 = pneg %p168
        %p264 = pneg %p165
        %p265 = pneg %p194
        %p266 = pneg %p191
        %s267 = sand.u32 %s181, 1
        %s268 = scalar_lea.sflag [#allocation3], %s267
        %s269 = sand.u32 %s181, 1
        %s270 = smul.addr %s269, 256
        %s271 = scalar_lea.vmem [#allocation2], %s270
        %p272 = scmp.lt.s32.totalorder %s21, 1
        %s273 = scalar_select %p272, %s21, 1
        %s274 = smul.addr %s273, 32
        %s275 = smul.addr %s274, 4
        %s276 = scalar_lea.vmem %s0, %s275
        %v278 = vld [vmem:[%s276] sm:$0xf]
        %v279 = vld [vmem:[%s276 + $0x4] sm:$0xf]
        %v280 = vld [vmem:[%s276 + $0x8] sm:$0xf]
        %v281 = vld [vmem:[%s276 + $0xc] sm:$0xf]
        %v282 = vld [vmem:[%s276 + $0x10] sm:$0xf]
        %v283 = vld [vmem:[%s276 + $0x14] sm:$0xf]
        %v284 = vld [vmem:[%s276 + $0x18] sm:$0xf]
        %v285 = vld [vmem:[%s276 + $0x1c] sm:$0xf]
        %v286 = vld [vmem:[%s276 + $0x20] sm:$0xf]
        %v287 = vld [vmem:[%s276 + $0x24] sm:$0xf]
        %v288 = vld [vmem:[%s276 + $0x28] sm:$0xf]
        %v289 = vld [vmem:[%s276 + $0x2c] sm:$0xf]
        %v290 = vld [vmem:[%s276 + $0x30] sm:$0xf]
        %v291 = vld [vmem:[%s276 + $0x34] sm:$0xf]
        %v292 = vld [vmem:[%s276 + $0x38] sm:$0xf]
        %v293 = vld [vmem:[%s276 + $0x3c] sm:$0xf]
        %v294 = vld [vmem:[%s276 + $0x40] sm:$0xf]
        %v295 = vld [vmem:[%s276 + $0x44] sm:$0xf]
        %v296 = vld [vmem:[%s276 + $0x48] sm:$0xf]
        %v297 = vld [vmem:[%s276 + $0x4c] sm:$0xf]
        %v298 = vld [vmem:[%s276 + $0x50] sm:$0xf]
        %v299 = vld [vmem:[%s276 + $0x54] sm:$0xf]
        %v300 = vld [vmem:[%s276 + $0x58] sm:$0xf]
        %v301 = vld [vmem:[%s276 + $0x5c] sm:$0xf]
        %v302 = vld [vmem:[%s276 + $0x60] sm:$0xf]
        %v303 = vld [vmem:[%s276 + $0x64] sm:$0xf]
        %v304 = vld [vmem:[%s276 + $0x68] sm:$0xf]
        %v305 = vld [vmem:[%s276 + $0x6c] sm:$0xf]
        %v306 = vld [vmem:[%s276 + $0x70] sm:$0xf]
        %v307 = vld [vmem:[%s276 + $0x74] sm:$0xf]
        %v308 = vld [vmem:[%s276 + $0x78] sm:$0xf]
        %v309 = vld [vmem:[%s276 + $0x7c] sm:$0xf]
        %v310 = vld [vmem:[%s1] sm:$0xf]
        %v311 = vld [vmem:[%s1 + $0x4] sm:$0xf]
        %v312 = vld [vmem:[%s1 + $0x8] sm:$0xf]
        %v313 = vld [vmem:[%s1 + $0xc] sm:$0xf]
        %v314 = vld [vmem:[%s1 + $0x10] sm:$0xf]
        %v315 = vld [vmem:[%s1 + $0x14] sm:$0xf]
        %v316 = vld [vmem:[%s1 + $0x18] sm:$0xf]
        %v317 = vld [vmem:[%s1 + $0x1c] sm:$0xf]
        %v318 = vld [vmem:[%s1 + $0x20] sm:$0xf]
        %v319 = vld [vmem:[%s1 + $0x24] sm:$0xf]
        %v320 = vld [vmem:[%s1 + $0x28] sm:$0xf]
        %v321 = vld [vmem:[%s1 + $0x2c] sm:$0xf]
        %v322 = vld [vmem:[%s1 + $0x30] sm:$0xf]
        %v323 = vld [vmem:[%s1 + $0x34] sm:$0xf]
        %v324 = vld [vmem:[%s1 + $0x38] sm:$0xf]
        %v325 = vld [vmem:[%s1 + $0x3c] sm:$0xf]
        %v326 = vld [vmem:[%s2] sm:$0x1]
        %v328 = vperm.slane %v326, 0
        %v362 = vunpack.c.l.b16 %v278
        %v363 = vunpack.c.l.b16 %v279
        %v364 = vunpack.c.l.b16 %v280
        %v365 = vunpack.c.l.b16 %v281
        %v366 = vunpack.c.l.b16 %v282
        %v367 = vunpack.c.l.b16 %v283
        %v368 = vunpack.c.l.b16 %v284
        %v369 = vunpack.c.l.b16 %v285
        %v370 = vunpack.c.l.b16 %v286
        %v371 = vunpack.c.l.b16 %v287
        %v372 = vunpack.c.l.b16 %v288
        %v373 = vunpack.c.l.b16 %v289
        %v374 = vunpack.c.l.b16 %v290
        %v375 = vunpack.c.l.b16 %v291
        %v376 = vunpack.c.l.b16 %v292
        %v377 = vunpack.c.l.b16 %v293
        %v378 = vunpack.c.l.b16 %v294
        %v379 = vunpack.c.l.b16 %v295
        %v380 = vunpack.c.l.b16 %v296
        %v381 = vunpack.c.l.b16 %v297
        %v382 = vunpack.c.l.b16 %v298
        %v383 = vunpack.c.l.b16 %v299
        %v384 = vunpack.c.l.b16 %v300
        %v385 = vunpack.c.l.b16 %v301
        %v386 = vunpack.c.l.b16 %v302
        %v387 = vunpack.c.l.b16 %v303
        %v388 = vunpack.c.l.b16 %v304
        %v389 = vunpack.c.l.b16 %v305
        %v390 = vunpack.c.l.b16 %v306
        %v391 = vunpack.c.l.b16 %v307
        %v392 = vunpack.c.l.b16 %v308
        %v393 = vunpack.c.l.b16 %v309
        %v394 = vpack.c.b16 %v363, %v362
        %v395 = vpack.c.b16 %v365, %v364
        %v396 = vpack.c.b16 %v367, %v366
        %v397 = vpack.c.b16 %v369, %v368
        %v398 = vpack.c.b16 %v371, %v370
        %v399 = vpack.c.b16 %v373, %v372
        %v400 = vpack.c.b16 %v375, %v374
        %v401 = vpack.c.b16 %v377, %v376
        %v402 = vpack.c.b16 %v379, %v378
        %v403 = vpack.c.b16 %v381, %v380
        %v404 = vpack.c.b16 %v383, %v382
        %v405 = vpack.c.b16 %v385, %v384
        %v406 = vpack.c.b16 %v387, %v386
        %v407 = vpack.c.b16 %v389, %v388
        %v408 = vpack.c.b16 %v391, %v390
        %v409 = vpack.c.b16 %v393, %v392
        %v442 = vunpack.c.l.b16 %v310
        %v443 = vunpack.c.l.b16 %v311
        %v444 = vunpack.c.l.b16 %v312
        %v445 = vunpack.c.l.b16 %v313
        %v446 = vunpack.c.l.b16 %v314
        %v447 = vunpack.c.l.b16 %v315
        %v448 = vunpack.c.l.b16 %v316
        %v449 = vunpack.c.l.b16 %v317
        %v450 = vunpack.c.l.b16 %v318
        %v451 = vunpack.c.l.b16 %v319
        %v452 = vunpack.c.l.b16 %v320
        %v453 = vunpack.c.l.b16 %v321
        %v454 = vunpack.c.l.b16 %v322
        %v455 = vunpack.c.l.b16 %v323
        %v456 = vunpack.c.l.b16 %v324
        %v457 = vunpack.c.l.b16 %v325
        %v458 = vpack.c.b16 %v443, %v442
        %v459 = vpack.c.b16 %v445, %v444
        %v460 = vpack.c.b16 %v447, %v446
        %v461 = vpack.c.b16 %v449, %v448
        %v462 = vpack.c.b16 %v451, %v450
        %v463 = vpack.c.b16 %v453, %v452
        %v464 = vpack.c.b16 %v455, %v454
        %v465 = vpack.c.b16 %v457, %v456
        %474 = vmatpush.bf16.msra.mxu0 %v465
        %475 = vmatpush.bf16.msra.mxu0 %v464
        %476 = vmatpush.bf16.msra.mxu0 %v463
        %477 = vmatpush.bf16.msra.mxu0 %v462
        %478 = vmatpush.bf16.msra.mxu0 %v461
        %479 = vmatpush.bf16.msra.mxu0 %v460
        %480 = vmatpush.bf16.msra.mxu0 %v459
        %481 = vmatpush.bf16.msra.mxu0 %v458
        %482 = vmatmul.bf16.gmra.mxu0 %v394
        %v483 = vpop.f32.mrf.mxu0
        %v484 = vadd.f32 %v328, %v483
        %v485 = vpop.f32.mrf.mxu0
        %v486 = vadd.f32 %v328, %v485
        %487 = vmatmul.bf16.gmra.mxu0 %v395
        %v488 = vpop.f32.mrf.mxu0
        %v489 = vadd.f32 %v328, %v488
        %v490 = vpop.f32.mrf.mxu0
        %v491 = vadd.f32 %v328, %v490
        %492 = vmatmul.bf16.gmra.mxu0 %v396
        %v493 = vpop.f32.mrf.mxu0
        %v494 = vadd.f32 %v328, %v493
        %v495 = vpop.f32.mrf.mxu0
        %v496 = vadd.f32 %v328, %v495
        %497 = vmatmul.bf16.gmra.mxu0 %v397
        %v498 = vpop.f32.mrf.mxu0
        %v499 = vadd.f32 %v328, %v498
        %v500 = vpop.f32.mrf.mxu0
        %v501 = vadd.f32 %v328, %v500
        %502 = vmatmul.bf16.gmra.mxu0 %v398
        %v503 = vpop.f32.mrf.mxu0
        %v504 = vadd.f32 %v328, %v503
        %v505 = vpop.f32.mrf.mxu0
        %v506 = vadd.f32 %v328, %v505
        %507 = vmatmul.bf16.gmra.mxu0 %v399
        %v508 = vpop.f32.mrf.mxu0
        %v509 = vadd.f32 %v328, %v508
        %v510 = vpop.f32.mrf.mxu0
        %v511 = vadd.f32 %v328, %v510
        %512 = vmatmul.bf16.gmra.mxu0 %v400
        %v513 = vpop.f32.mrf.mxu0
        %v514 = vadd.f32 %v328, %v513
        %v515 = vpop.f32.mrf.mxu0
        %v516 = vadd.f32 %v328, %v515
        %517 = vmatmul.bf16.gmra.mxu0 %v401
        %v518 = vpop.f32.mrf.mxu0
        %v519 = vadd.f32 %v328, %v518
        %v520 = vpop.f32.mrf.mxu0
        %v521 = vadd.f32 %v328, %v520
        %522 = vmatmul.bf16.gmra.mxu0 %v402
        %v523 = vpop.f32.mrf.mxu0
        %v524 = vadd.f32 %v328, %v523
        %v525 = vpop.f32.mrf.mxu0
        %v526 = vadd.f32 %v328, %v525
        %527 = vmatmul.bf16.gmra.mxu0 %v403
        %v528 = vpop.f32.mrf.mxu0
        %v529 = vadd.f32 %v328, %v528
        %v530 = vpop.f32.mrf.mxu0
        %v531 = vadd.f32 %v328, %v530
        %532 = vmatmul.bf16.gmra.mxu0 %v404
        %v533 = vpop.f32.mrf.mxu0
        %v534 = vadd.f32 %v328, %v533
        %v535 = vpop.f32.mrf.mxu0
        %v536 = vadd.f32 %v328, %v535
        %537 = vmatmul.bf16.gmra.mxu0 %v405
        %v538 = vpop.f32.mrf.mxu0
        %v539 = vadd.f32 %v328, %v538
        %v540 = vpop.f32.mrf.mxu0
        %v541 = vadd.f32 %v328, %v540
        %542 = vmatmul.bf16.gmra.mxu0 %v406
        %v543 = vpop.f32.mrf.mxu0
        %v544 = vadd.f32 %v328, %v543
        %v545 = vpop.f32.mrf.mxu0
        %v546 = vadd.f32 %v328, %v545
        %547 = vmatmul.bf16.gmra.mxu0 %v407
        %v548 = vpop.f32.mrf.mxu0
        %v549 = vadd.f32 %v328, %v548
        %v550 = vpop.f32.mrf.mxu0
        %v551 = vadd.f32 %v328, %v550
        %552 = vmatmul.bf16.gmra.mxu0 %v408
        %v553 = vpop.f32.mrf.mxu0
        %v554 = vadd.f32 %v328, %v553
        %v555 = vpop.f32.mrf.mxu0
        %v556 = vadd.f32 %v328, %v555
        %557 = vmatmul.bf16.gmra.mxu0 %v409
        %v558 = vpop.f32.mrf.mxu0
        %v559 = vadd.f32 %v328, %v558
        %v560 = vpop.f32.mrf.mxu0
        %v561 = vadd.f32 %v328, %v560
        %562 = vdwg.mxu0
        %v563 = vmax.f32 %v484, 0.0
        %v564 = vmax.f32 %v486, 0.0
        %v565 = vmax.f32 %v489, 0.0
        %v566 = vmax.f32 %v491, 0.0
        %v567 = vmax.f32 %v494, 0.0
        %v568 = vmax.f32 %v496, 0.0
        %v569 = vmax.f32 %v499, 0.0
        %v570 = vmax.f32 %v501, 0.0
        %v571 = vmax.f32 %v504, 0.0
        %v572 = vmax.f32 %v506, 0.0
        %v573 = vmax.f32 %v509, 0.0
        %v574 = vmax.f32 %v511, 0.0
        %v575 = vmax.f32 %v514, 0.0
        %v576 = vmax.f32 %v516, 0.0
        %v577 = vmax.f32 %v519, 0.0
        %v578 = vmax.f32 %v521, 0.0
        %v579 = vmax.f32 %v524, 0.0
        %v580 = vmax.f32 %v526, 0.0
        %v581 = vmax.f32 %v529, 0.0
        %v582 = vmax.f32 %v531, 0.0
        %v583 = vmax.f32 %v534, 0.0
        %v584 = vmax.f32 %v536, 0.0
        %v585 = vmax.f32 %v539, 0.0
        %v586 = vmax.f32 %v541, 0.0
        %v587 = vmax.f32 %v544, 0.0
        %v588 = vmax.f32 %v546, 0.0
        %v589 = vmax.f32 %v549, 0.0
        %v590 = vmax.f32 %v551, 0.0
        %v591 = vmax.f32 %v554, 0.0
        %v592 = vmax.f32 %v556, 0.0
        %v593 = vmax.f32 %v559, 0.0
        %v594 = vmax.f32 %v561, 0.0
        %v595 = vlaneseq
        %v596 = vshrl.u32 %v595, 7
        %v597 = vadd.s32 %v596, 8
        %v598 = vrot.slane %v563, 7
        %v599 = vrot.slane %v565, 7
        %v600 = vrot.slane %v567, 7
        %v601 = vrot.slane %v569, 7
        %v602 = vrot.slane %v571, 7
        %v603 = vrot.slane %v573, 7
        %v604 = vrot.slane %v575, 7
        %v605 = vrot.slane %v577, 7
        %v606 = vrot.slane %v579, 7
        %v607 = vrot.slane %v581, 7
        %v608 = vrot.slane %v583, 7
        %v609 = vrot.slane %v585, 7
        %v610 = vrot.slane %v587, 7
        %v611 = vrot.slane %v589, 7
        %v612 = vrot.slane %v591, 7
        %v613 = vrot.slane %v593, 7
        %v614 = vrot.slane %v564, 7
        %v615 = vrot.slane %v566, 7
        %v616 = vrot.slane %v568, 7
        %v617 = vrot.slane %v570, 7
        %v618 = vrot.slane %v572, 7
        %v619 = vrot.slane %v574, 7
        %v620 = vrot.slane %v576, 7
        %v621 = vrot.slane %v578, 7
        %v622 = vrot.slane %v580, 7
        %v623 = vrot.slane %v582, 7
        %v624 = vrot.slane %v584, 7
        %v625 = vrot.slane %v586, 7
        %v626 = vrot.slane %v588, 7
        %v627 = vrot.slane %v590, 7
        %v628 = vrot.slane %v592, 7
        %v629 = vrot.slane %v594, 7
        %vm630 = vcmp.lt.s32.totalorder %v596, 1
        %v631 = vsel %vm630, %v598, %v614
        %v632 = vsel %vm630, %v599, %v615
        %v633 = vsel %vm630, %v600, %v616
        %v634 = vsel %vm630, %v601, %v617
        %v635 = vsel %vm630, %v602, %v618
        %v636 = vsel %vm630, %v603, %v619
        %v637 = vsel %vm630, %v604, %v620
        %v638 = vsel %vm630, %v605, %v621
        %v639 = vsel %vm630, %v606, %v622
        %v640 = vsel %vm630, %v607, %v623
        %v641 = vsel %vm630, %v608, %v624
        %v642 = vsel %vm630, %v609, %v625
        %v643 = vsel %vm630, %v610, %v626
        %v644 = vsel %vm630, %v611, %v627
        %v645 = vsel %vm630, %v612, %v628
        %v646 = vsel %vm630, %v613, %v629
        %v647 = vsel %vm630, %v614, %v598
        %v648 = vsel %vm630, %v615, %v599
        %v649 = vsel %vm630, %v616, %v600
        %v650 = vsel %vm630, %v617, %v601
        %v651 = vsel %vm630, %v618, %v602
        %v652 = vsel %vm630, %v619, %v603
        %v653 = vsel %vm630, %v620, %v604
        %v654 = vsel %vm630, %v621, %v605
        %v655 = vsel %vm630, %v622, %v606
        %v656 = vsel %vm630, %v623, %v607
        %v657 = vsel %vm630, %v624, %v608
        %v658 = vsel %vm630, %v625, %v609
        %v659 = vsel %vm630, %v626, %v610
        %v660 = vsel %vm630, %v627, %v611
        %v661 = vsel %vm630, %v628, %v612
        %v662 = vsel %vm630, %v629, %v613
        %v663 = vrot.slane %v563, 1
        %v664 = vrot.slane %v565, 1
        %v665 = vrot.slane %v567, 1
        %v666 = vrot.slane %v569, 1
        %v667 = vrot.slane %v571, 1
        %v668 = vrot.slane %v573, 1
        %v669 = vrot.slane %v575, 1
        %v670 = vrot.slane %v577, 1
        %v671 = vrot.slane %v579, 1
        %v672 = vrot.slane %v581, 1
        %v673 = vrot.slane %v583, 1
        %v674 = vrot.slane %v585, 1
        %v675 = vrot.slane %v587, 1
        %v676 = vrot.slane %v589, 1
        %v677 = vrot.slane %v591, 1
        %v678 = vrot.slane %v593, 1
        %v679 = vrot.slane %v564, 1
        %v680 = vrot.slane %v566, 1
        %v681 = vrot.slane %v568, 1
        %v682 = vrot.slane %v570, 1
        %v683 = vrot.slane %v572, 1
        %v684 = vrot.slane %v574, 1
        %v685 = vrot.slane %v576, 1
        %v686 = vrot.slane %v578, 1
        %v687 = vrot.slane %v580, 1
        %v688 = vrot.slane %v582, 1
        %v689 = vrot.slane %v584, 1
        %v690 = vrot.slane %v586, 1
        %v691 = vrot.slane %v588, 1
        %v692 = vrot.slane %v590, 1
        %v693 = vrot.slane %v592, 1
        %v694 = vrot.slane %v594, 1
        %vm695 = vcmp.lt.s32.totalorder %v596, 7
        %v696 = vsel %vm695, %v663, %v679
        %v697 = vsel %vm695, %v664, %v680
        %v698 = vsel %vm695, %v665, %v681
        %v699 = vsel %vm695, %v666, %v682
        %v700 = vsel %vm695, %v667, %v683
        %v701 = vsel %vm695, %v668, %v684
        %v702 = vsel %vm695, %v669, %v685
        %v703 = vsel %vm695, %v670, %v686
        %v704 = vsel %vm695, %v671, %v687
        %v705 = vsel %vm695, %v672, %v688
        %v706 = vsel %vm695, %v673, %v689
        %v707 = vsel %vm695, %v674, %v690
        %v708 = vsel %vm695, %v675, %v691
        %v709 = vsel %vm695, %v676, %v692
        %v710 = vsel %vm695, %v677, %v693
        %v711 = vsel %vm695, %v678, %v694
        %v712 = vsel %vm695, %v679, %v663
        %v713 = vsel %vm695, %v680, %v664
        %v714 = vsel %vm695, %v681, %v665
        %v715 = vsel %vm695, %v682, %v666
        %v716 = vsel %vm695, %v683, %v667
        %v717 = vsel %vm695, %v684, %v668
        %v718 = vsel %vm695, %v685, %v669
        %v719 = vsel %vm695, %v686, %v670
        %v720 = vsel %vm695, %v687, %v671
        %v721 = vsel %vm695, %v688, %v672
        %v722 = vsel %vm695, %v689, %v673
        %v723 = vsel %vm695, %v690, %v674
        %v724 = vsel %vm695, %v691, %v675
        %v725 = vsel %vm695, %v692, %v676
        %v726 = vsel %vm695, %v693, %v677
        %v727 = vsel %vm695, %v694, %v678
        %v728 = vrot.slane %v596, 7
        %v729 = vrot.slane %v597, 7
        %v730 = vsel %vm630, %v728, %v729
        %v731 = vsel %vm630, %v729, %v728
        %v732 = vsub.s32 %v596, 1
        %v733 = vsub.s32 %v597, 1
        %vm734 = vcmp.eq.s32.totalorder %v731, %v732
        %vm735 = vcmp.eq.s32.totalorder %v730, %v733
        %v736 = vsel %vm734, %v647, %v696
        %v737 = vsel %vm735, %v631, %v712
        %v738 = vsel %vm734, %v648, %v697
        %v739 = vsel %vm735, %v632, %v713
        %v740 = vsel %vm734, %v649, %v698
        %v741 = vsel %vm735, %v633, %v714
        %v742 = vsel %vm734, %v650, %v699
        %v743 = vsel %vm735, %v634, %v715
        %v744 = vsel %vm734, %v651, %v700
        %v745 = vsel %vm735, %v635, %v716
        %v746 = vsel %vm734, %v652, %v701
        %v747 = vsel %vm735, %v636, %v717
        %v748 = vsel %vm734, %v653, %v702
        %v749 = vsel %vm735, %v637, %v718
        %v750 = vsel %vm734, %v654, %v703
        %v751 = vsel %vm735, %v638, %v719
        %v752 = vsel %vm734, %v655, %v704
        %v753 = vsel %vm735, %v639, %v720
        %v754 = vsel %vm734, %v656, %v705
        %v755 = vsel %vm735, %v640, %v721
        %v756 = vsel %vm734, %v657, %v706
        %v757 = vsel %vm735, %v641, %v722
        %v758 = vsel %vm734, %v658, %v707
        %v759 = vsel %vm735, %v642, %v723
        %v760 = vsel %vm734, %v659, %v708
        %v761 = vsel %vm735, %v643, %v724
        %v762 = vsel %vm734, %v660, %v709
        %v763 = vsel %vm735, %v644, %v725
        %v764 = vsel %vm734, %v661, %v710
        %v765 = vsel %vm735, %v645, %v726
        %v766 = vsel %vm734, %v662, %v711
        %v767 = vsel %vm735, %v646, %v727
        %vm768 = vcmp.eq.s32.totalorder %v596, 0
        %vm769 = vcmp.eq.s32.totalorder %v597, 0
        %v770 = vsel %vm768, 0.0, %v736
        %v771 = vsel %vm769, 0.0, %v737
        %v772 = vsel %vm768, 0.0, %v738
        %v773 = vsel %vm769, 0.0, %v739
        %v774 = vsel %vm768, 0.0, %v740
        %v775 = vsel %vm769, 0.0, %v741
        %v776 = vsel %vm768, 0.0, %v742
        %v777 = vsel %vm769, 0.0, %v743
        %v778 = vsel %vm768, 0.0, %v744
        %v779 = vsel %vm769, 0.0, %v745
        %v780 = vsel %vm768, 0.0, %v746
        %v781 = vsel %vm769, 0.0, %v747
        %v782 = vsel %vm768, 0.0, %v748
        %v783 = vsel %vm769, 0.0, %v749
        %v784 = vsel %vm768, 0.0, %v750
        %v785 = vsel %vm769, 0.0, %v751
        %v786 = vsel %vm768, 0.0, %v752
        %v787 = vsel %vm769, 0.0, %v753
        %v788 = vsel %vm768, 0.0, %v754
        %v789 = vsel %vm769, 0.0, %v755
        %v790 = vsel %vm768, 0.0, %v756
        %v791 = vsel %vm769, 0.0, %v757
        %v792 = vsel %vm768, 0.0, %v758
        %v793 = vsel %vm769, 0.0, %v759
        %v794 = vsel %vm768, 0.0, %v760
        %v795 = vsel %vm769, 0.0, %v761
        %v796 = vsel %vm768, 0.0, %v762
        %v797 = vsel %vm769, 0.0, %v763
        %v798 = vsel %vm768, 0.0, %v764
        %v799 = vsel %vm769, 0.0, %v765
        %v800 = vsel %vm768, 0.0, %v766
        %v801 = vsel %vm769, 0.0, %v767
        %v802 = vadd.s32 %v596, 1
        %v803 = vadd.s32 %v597, 1
        %vm804 = vcmp.eq.s32.totalorder %v731, %v802
        %vm805 = vcmp.eq.s32.totalorder %v730, %v803
        %v806 = vsel %vm804, %v647, %v696
        %v807 = vsel %vm805, %v631, %v712
        %v808 = vsel %vm804, %v648, %v697
        %v809 = vsel %vm805, %v632, %v713
        %v810 = vsel %vm804, %v649, %v698
        %v811 = vsel %vm805, %v633, %v714
        %v812 = vsel %vm804, %v650, %v699
        %v813 = vsel %vm805, %v634, %v715
        %v814 = vsel %vm804, %v651, %v700
        %v815 = vsel %vm805, %v635, %v716
        %v816 = vsel %vm804, %v652, %v701
        %v817 = vsel %vm805, %v636, %v717
        %v818 = vsel %vm804, %v653, %v702
        %v819 = vsel %vm805, %v637, %v718
        %v820 = vsel %vm804, %v654, %v703
        %v821 = vsel %vm805, %v638, %v719
        %v822 = vsel %vm804, %v655, %v704
        %v823 = vsel %vm805, %v639, %v720
        %v824 = vsel %vm804, %v656, %v705
        %v825 = vsel %vm805, %v640, %v721
        %v826 = vsel %vm804, %v657, %v706
        %v827 = vsel %vm805, %v641, %v722
        %v828 = vsel %vm804, %v658, %v707
        %v829 = vsel %vm805, %v642, %v723
        %v830 = vsel %vm804, %v659, %v708
        %v831 = vsel %vm805, %v643, %v724
        %v832 = vsel %vm804, %v660, %v709
        %v833 = vsel %vm805, %v644, %v725
        %v834 = vsel %vm804, %v661, %v710
        %v835 = vsel %vm805, %v645, %v726
        %v836 = vsel %vm804, %v662, %v711
        %v837 = vsel %vm805, %v646, %v727
        %vm838 = vcmp.eq.s32.totalorder %v596, 15
        %vm839 = vcmp.eq.s32.totalorder %v597, 15
        %v840 = vsel %vm838, 0.0, %v806
        %v841 = vsel %vm839, 0.0, %v807
        %v842 = vsel %vm838, 0.0, %v808
        %v843 = vsel %vm839, 0.0, %v809
        %v844 = vsel %vm838, 0.0, %v810
        %v845 = vsel %vm839, 0.0, %v811
        %v846 = vsel %vm838, 0.0, %v812
        %v847 = vsel %vm839, 0.0, %v813
        %v848 = vsel %vm838, 0.0, %v814
        %v849 = vsel %vm839, 0.0, %v815
        %v850 = vsel %vm838, 0.0, %v816
        %v851 = vsel %vm839, 0.0, %v817
        %v852 = vsel %vm838, 0.0, %v818
        %v853 = vsel %vm839, 0.0, %v819
        %v854 = vsel %vm838, 0.0, %v820
        %v855 = vsel %vm839, 0.0, %v821
        %v856 = vsel %vm838, 0.0, %v822
        %v857 = vsel %vm839, 0.0, %v823
        %v858 = vsel %vm838, 0.0, %v824
        %v859 = vsel %vm839, 0.0, %v825
        %v860 = vsel %vm838, 0.0, %v826
        %v861 = vsel %vm839, 0.0, %v827
        %v862 = vsel %vm838, 0.0, %v828
        %v863 = vsel %vm839, 0.0, %v829
        %v864 = vsel %vm838, 0.0, %v830
        %v865 = vsel %vm839, 0.0, %v831
        %v866 = vsel %vm838, 0.0, %v832
        %v867 = vsel %vm839, 0.0, %v833
        %v868 = vsel %vm838, 0.0, %v834
        %v869 = vsel %vm839, 0.0, %v835
        %v870 = vsel %vm838, 0.0, %v836
        %v871 = vsel %vm839, 0.0, %v837
        %v872 = vpack.c.bf16 %v563, %v770
        %v873 = vpack.c.bf16 %v840, %v840
        %v874 = vpack.c.bf16 %v564, %v771
        %v875 = vpack.c.bf16 %v841, %v841
        %v876 = vpack.c.bf16 %v565, %v772
        %v877 = vpack.c.bf16 %v842, %v842
        %v878 = vpack.c.bf16 %v566, %v773
        %v879 = vpack.c.bf16 %v843, %v843
        %v880 = vpack.c.bf16 %v567, %v774
        %v881 = vpack.c.bf16 %v844, %v844
        %v882 = vpack.c.bf16 %v568, %v775
        %v883 = vpack.c.bf16 %v845, %v845
        %v884 = vpack.c.bf16 %v569, %v776
        %v885 = vpack.c.bf16 %v846, %v846
        %v886 = vpack.c.bf16 %v570, %v777
        %v887 = vpack.c.bf16 %v847, %v847
        %v888 = vpack.c.bf16 %v571, %v778
        %v889 = vpack.c.bf16 %v848, %v848
        %v890 = vpack.c.bf16 %v572, %v779
        %v891 = vpack.c.bf16 %v849, %v849
        %v892 = vpack.c.bf16 %v573, %v780
        %v893 = vpack.c.bf16 %v850, %v850
        %v894 = vpack.c.bf16 %v574, %v781
        %v895 = vpack.c.bf16 %v851, %v851
        %v896 = vpack.c.bf16 %v575, %v782
        %v897 = vpack.c.bf16 %v852, %v852
        %v898 = vpack.c.bf16 %v576, %v783
        %v899 = vpack.c.bf16 %v853, %v853
        %v900 = vpack.c.bf16 %v577, %v784
        %v901 = vpack.c.bf16 %v854, %v854
        %v902 = vpack.c.bf16 %v578, %v785
        %v903 = vpack.c.bf16 %v855, %v855
        %v904 = vpack.c.bf16 %v579, %v786
        %v905 = vpack.c.bf16 %v856, %v856
        %v906 = vpack.c.bf16 %v580, %v787
        %v907 = vpack.c.bf16 %v857, %v857
        %v908 = vpack.c.bf16 %v581, %v788
        %v909 = vpack.c.bf16 %v858, %v858
        %v910 = vpack.c.bf16 %v582, %v789
        %v911 = vpack.c.bf16 %v859, %v859
        %v912 = vpack.c.bf16 %v583, %v790
        %v913 = vpack.c.bf16 %v860, %v860
        %v914 = vpack.c.bf16 %v584, %v791
        %v915 = vpack.c.bf16 %v861, %v861
        %v916 = vpack.c.bf16 %v585, %v792
        %v917 = vpack.c.bf16 %v862, %v862
        %v918 = vpack.c.bf16 %v586, %v793
        %v919 = vpack.c.bf16 %v863, %v863
        %v920 = vpack.c.bf16 %v587, %v794
        %v921 = vpack.c.bf16 %v864, %v864
        %v922 = vpack.c.bf16 %v588, %v795
        %v923 = vpack.c.bf16 %v865, %v865
        %v924 = vpack.c.bf16 %v589, %v796
        %v925 = vpack.c.bf16 %v866, %v866
        %v926 = vpack.c.bf16 %v590, %v797
        %v927 = vpack.c.bf16 %v867, %v867
        %v928 = vpack.c.bf16 %v591, %v798
        %v929 = vpack.c.bf16 %v868, %v868
        %v930 = vpack.c.bf16 %v592, %v799
        %v931 = vpack.c.bf16 %v869, %v869
        %v932 = vpack.c.bf16 %v593, %v800
        %v933 = vpack.c.bf16 %v870, %v870
        %v934 = vpack.c.bf16 %v594, %v801
        %v935 = vpack.c.bf16 %v871, %v871
        %v996 = vunpack.c.l.b16 %v872
        %v997 = vunpack.c.h.b16 %v872
        %v998 = vunpack.c.l.b16 %v873
        %v999 = vunpack.c.l.b16 %v874
        %v1000 = vunpack.c.h.b16 %v874
        %v1001 = vunpack.c.l.b16 %v875
        %v1002 = vunpack.c.l.b16 %v876
        %v1003 = vunpack.c.h.b16 %v876
        %v1004 = vunpack.c.l.b16 %v877
        %v1005 = vunpack.c.l.b16 %v878
        %v1006 = vunpack.c.h.b16 %v878
        %v1007 = vunpack.c.l.b16 %v879
        %v1008 = vunpack.c.l.b16 %v880
        %v1009 = vunpack.c.h.b16 %v880
        %v1010 = vunpack.c.l.b16 %v881
        %v1011 = vunpack.c.l.b16 %v882
        %v1012 = vunpack.c.h.b16 %v882
        %v1013 = vunpack.c.l.b16 %v883
        %v1014 = vunpack.c.l.b16 %v884
        %v1015 = vunpack.c.h.b16 %v884
        %v1016 = vunpack.c.l.b16 %v885
        %v1017 = vunpack.c.l.b16 %v886
        %v1018 = vunpack.c.h.b16 %v886
        %v1019 = vunpack.c.l.b16 %v887
        %v1020 = vunpack.c.l.b16 %v888
        %v1021 = vunpack.c.h.b16 %v888
        %v1022 = vunpack.c.l.b16 %v889
        %v1023 = vunpack.c.l.b16 %v890
        %v1024 = vunpack.c.h.b16 %v890
        %v1025 = vunpack.c.l.b16 %v891
        %v1026 = vunpack.c.l.b16 %v892
        %v1027 = vunpack.c.h.b16 %v892
        %v1028 = vunpack.c.l.b16 %v893
        %v1029 = vunpack.c.l.b16 %v894
        %v1030 = vunpack.c.h.b16 %v894
        %v1031 = vunpack.c.l.b16 %v895
        %v1032 = vunpack.c.l.b16 %v896
        %v1033 = vunpack.c.h.b16 %v896
        %v1034 = vunpack.c.l.b16 %v897
        %v1035 = vunpack.c.l.b16 %v898
        %v1036 = vunpack.c.h.b16 %v898
        %v1037 = vunpack.c.l.b16 %v899
        %v1038 = vunpack.c.l.b16 %v900
        %v1039 = vunpack.c.h.b16 %v900
        %v1040 = vunpack.c.l.b16 %v901
        %v1041 = vunpack.c.l.b16 %v902
        %v1042 = vunpack.c.h.b16 %v902
        %v1043 = vunpack.c.l.b16 %v903
        %v1044 = vunpack.c.l.b16 %v904
        %v1045 = vunpack.c.h.b16 %v904
        %v1046 = vunpack.c.l.b16 %v905
        %v1047 = vunpack.c.l.b16 %v906
        %v1048 = vunpack.c.h.b16 %v906
        %v1049 = vunpack.c.l.b16 %v907
        %v1050 = vunpack.c.l.b16 %v908
        %v1051 = vunpack.c.h.b16 %v908
        %v1052 = vunpack.c.l.b16 %v909
        %v1053 = vunpack.c.l.b16 %v910
        %v1054 = vunpack.c.h.b16 %v910
        %v1055 = vunpack.c.l.b16 %v911
        %v1056 = vunpack.c.l.b16 %v912
        %v1057 = vunpack.c.h.b16 %v912
        %v1058 = vunpack.c.l.b16 %v913
        %v1059 = vunpack.c.l.b16 %v914
        %v1060 = vunpack.c.h.b16 %v914
        %v1061 = vunpack.c.l.b16 %v915
        %v1062 = vunpack.c.l.b16 %v916
        %v1063 = vunpack.c.h.b16 %v916
        %v1064 = vunpack.c.l.b16 %v917
        %v1065 = vunpack.c.l.b16 %v918
        %v1066 = vunpack.c.h.b16 %v918
        %v1067 = vunpack.c.l.b16 %v919
        %v1068 = vunpack.c.l.b16 %v920
        %v1069 = vunpack.c.h.b16 %v920
        %v1070 = vunpack.c.l.b16 %v921
        %v1071 = vunpack.c.l.b16 %v922
        %v1072 = vunpack.c.h.b16 %v922
        %v1073 = vunpack.c.l.b16 %v923
        %v1074 = vunpack.c.l.b16 %v924
        %v1075 = vunpack.c.h.b16 %v924
        %v1076 = vunpack.c.l.b16 %v925
        %v1077 = vunpack.c.l.b16 %v926
        %v1078 = vunpack.c.h.b16 %v926
        %v1079 = vunpack.c.l.b16 %v927
        %v1080 = vunpack.c.l.b16 %v928
        %v1081 = vunpack.c.h.b16 %v928
        %v1082 = vunpack.c.l.b16 %v929
        %v1083 = vunpack.c.l.b16 %v930
        %v1084 = vunpack.c.h.b16 %v930
        %v1085 = vunpack.c.l.b16 %v931
        %v1086 = vpack.c.b16 %v999, %v996
        %v1087 = vpack.c.b16 %v1000, %v997
        %v1088 = vpack.c.b16 %v1001, %v998
        %v1089 = vpack.c.b16 %v1005, %v1002
        %v1090 = vpack.c.b16 %v1006, %v1003
        %v1091 = vpack.c.b16 %v1007, %v1004
        %v1092 = vpack.c.b16 %v1011, %v1008
        %v1093 = vpack.c.b16 %v1012, %v1009
        %v1094 = vpack.c.b16 %v1013, %v1010
        %v1095 = vpack.c.b16 %v1017, %v1014
        %v1096 = vpack.c.b16 %v1018, %v1015
        %v1097 = vpack.c.b16 %v1019, %v1016
        %v1098 = vpack.c.b16 %v1023, %v1020
        %v1099 = vpack.c.b16 %v1024, %v1021
        %v1100 = vpack.c.b16 %v1025, %v1022
        %v1101 = vpack.c.b16 %v1029, %v1026
        %v1102 = vpack.c.b16 %v1030, %v1027
        %v1103 = vpack.c.b16 %v1031, %v1028
        %v1104 = vpack.c.b16 %v1035, %v1032
        %v1105 = vpack.c.b16 %v1036, %v1033
        %v1106 = vpack.c.b16 %v1037, %v1034
        %v1107 = vpack.c.b16 %v1041, %v1038
        %v1108 = vpack.c.b16 %v1042, %v1039
        %v1109 = vpack.c.b16 %v1043, %v1040
        %v1110 = vpack.c.b16 %v1047, %v1044
        %v1111 = vpack.c.b16 %v1048, %v1045
        %v1112 = vpack.c.b16 %v1049, %v1046
        %v1113 = vpack.c.b16 %v1053, %v1050
        %v1114 = vpack.c.b16 %v1054, %v1051
        %v1115 = vpack.c.b16 %v1055, %v1052
        %v1116 = vpack.c.b16 %v1059, %v1056
        %v1117 = vpack.c.b16 %v1060, %v1057
        %v1118 = vpack.c.b16 %v1061, %v1058
        %v1119 = vpack.c.b16 %v1065, %v1062
        %v1120 = vpack.c.b16 %v1066, %v1063
        %v1121 = vpack.c.b16 %v1067, %v1064
        %v1122 = vpack.c.b16 %v1071, %v1068
        %v1123 = vpack.c.b16 %v1072, %v1069
        %v1124 = vpack.c.b16 %v1073, %v1070
        %v1125 = vpack.c.b16 %v1077, %v1074
        %v1126 = vpack.c.b16 %v1078, %v1075
        %v1127 = vpack.c.b16 %v1079, %v1076
        %v1128 = vpack.c.b16 %v1083, %v1080
        %v1129 = vpack.c.b16 %v1084, %v1081
        %v1130 = vpack.c.b16 %v1085, %v1082
        %v1176 = vld [vmem:[%s3] sm:$0xf]
        %v1177 = vld [vmem:[%s3 + $0x4] sm:$0xf]
        %v1178 = vld [vmem:[%s3 + $0x8] sm:$0xf]
        %v1179 = vld [vmem:[%s3 + $0xc] sm:$0xf]
        %v1180 = vld [vmem:[%s3 + $0x10] sm:$0xf]
        %v1181 = vld [vmem:[%s3 + $0x14] sm:$0xf]
        %v1182 = vld [vmem:[%s3 + $0x18] sm:$0xf]
        %v1183 = vld [vmem:[%s3 + $0x1c] sm:$0xf]
        %v1184 = vld [vmem:[%s3 + $0x20] sm:$0xf]
        %v1185 = vld [vmem:[%s3 + $0x24] sm:$0xf]
        %v1186 = vld [vmem:[%s3 + $0x28] sm:$0xf]
        %v1187 = vld [vmem:[%s3 + $0x2c] sm:$0xf]
        %v1188 = vld [vmem:[%s3 + $0x30] sm:$0xf]
        %v1189 = vld [vmem:[%s3 + $0x34] sm:$0xf]
        %v1190 = vld [vmem:[%s3 + $0x38] sm:$0xf]
        %v1191 = vld [vmem:[%s3 + $0x3c] sm:$0xf]
        %v1192 = vld [vmem:[%s3 + $0x40] sm:$0xf]
        %v1193 = vld [vmem:[%s3 + $0x44] sm:$0xf]
        %v1194 = vld [vmem:[%s3 + $0x48] sm:$0xf]
        %v1195 = vld [vmem:[%s3 + $0x4c] sm:$0xf]
        %v1196 = vld [vmem:[%s3 + $0x50] sm:$0xf]
        %v1197 = vld [vmem:[%s3 + $0x54] sm:$0xf]
        %v1198 = vld [vmem:[%s3 + $0x58] sm:$0xf]
        %v1199 = vld [vmem:[%s3 + $0x5c] sm:$0xf]
        %v1200 = vld [vmem:[%s3 + $0x60] sm:$0xf]
        %v1201 = vld [vmem:[%s3 + $0x64] sm:$0xf]
        %v1202 = vld [vmem:[%s3 + $0x68] sm:$0xf]
        %v1203 = vld [vmem:[%s3 + $0x6c] sm:$0xf]
        %v1204 = vld [vmem:[%s3 + $0x70] sm:$0xf]
        %v1205 = vld [vmem:[%s3 + $0x74] sm:$0xf]
        %v1206 = vld [vmem:[%s3 + $0x78] sm:$0xf]
        %v1207 = vld [vmem:[%s3 + $0x7c] sm:$0xf]
        %v1208 = vld [vmem:[%s3 + $0x80] sm:$0xf]
        %v1209 = vld [vmem:[%s3 + $0x84] sm:$0xf]
        %v1210 = vld [vmem:[%s3 + $0x88] sm:$0xf]
        %v1211 = vld [vmem:[%s3 + $0x8c] sm:$0xf]
        %v1212 = vld [vmem:[%s3 + $0x90] sm:$0xf]
        %v1213 = vld [vmem:[%s3 + $0x94] sm:$0xf]
        %v1214 = vld [vmem:[%s3 + $0x98] sm:$0xf]
        %v1215 = vld [vmem:[%s3 + $0x9c] sm:$0xf]
        %v1216 = vld [vmem:[%s3 + $0xa0] sm:$0xf]
        %v1217 = vld [vmem:[%s3 + $0xa4] sm:$0xf]
        %v1218 = vld [vmem:[%s3 + $0xa8] sm:$0xf]
        %v1219 = vld [vmem:[%s3 + $0xac] sm:$0xf]
        %v1220 = vld [vmem:[%s3 + $0xb0] sm:$0xf]
        %v1221 = vld [vmem:[%s3 + $0xb4] sm:$0xf]
        %v1222 = vld [vmem:[%s3 + $0xb8] sm:$0xf]
        %v1223 = vld [vmem:[%s3 + $0xbc] sm:$0xf]
        %s1224 = scalar_lea.vmem %s3, 192
        %v1225 = vld [vmem:[%s1224] sm:$0xf]
        %v1226 = vld [vmem:[%s1224 + $0x4] sm:$0xf]
        %v1227 = vld [vmem:[%s1224 + $0x8] sm:$0xf]
        %v1228 = vld [vmem:[%s1224 + $0xc] sm:$0xf]
        %v1229 = vld [vmem:[%s1224 + $0x10] sm:$0xf]
        %v1230 = vld [vmem:[%s1224 + $0x14] sm:$0xf]
        %v1231 = vld [vmem:[%s1224 + $0x18] sm:$0xf]
        %v1232 = vld [vmem:[%s1224 + $0x1c] sm:$0xf]
        %v1233 = vld [vmem:[%s1224 + $0x20] sm:$0xf]
        %v1234 = vld [vmem:[%s1224 + $0x24] sm:$0xf]
        %v1235 = vld [vmem:[%s1224 + $0x28] sm:$0xf]
        %v1236 = vld [vmem:[%s1224 + $0x2c] sm:$0xf]
        %v1237 = vld [vmem:[%s1224 + $0x30] sm:$0xf]
        %v1238 = vld [vmem:[%s1224 + $0x34] sm:$0xf]
        %v1239 = vld [vmem:[%s1224 + $0x38] sm:$0xf]
        %v1240 = vld [vmem:[%s1224 + $0x3c] sm:$0xf]
        %v1241 = vld [vmem:[%s1224 + $0x40] sm:$0xf]
        %v1242 = vld [vmem:[%s1224 + $0x44] sm:$0xf]
        %v1243 = vld [vmem:[%s1224 + $0x48] sm:$0xf]
        %v1244 = vld [vmem:[%s1224 + $0x4c] sm:$0xf]
        %v1245 = vld [vmem:[%s1224 + $0x50] sm:$0xf]
        %v1246 = vld [vmem:[%s1224 + $0x54] sm:$0xf]
        %v1247 = vld [vmem:[%s1224 + $0x58] sm:$0xf]
        %v1248 = vld [vmem:[%s1224 + $0x5c] sm:$0xf]
        %v1249 = vld [vmem:[%s1224 + $0x60] sm:$0xf]
        %v1250 = vld [vmem:[%s1224 + $0x64] sm:$0xf]
        %v1251 = vld [vmem:[%s1224 + $0x68] sm:$0xf]
        %v1252 = vld [vmem:[%s1224 + $0x6c] sm:$0xf]
        %v1253 = vld [vmem:[%s1224 + $0x70] sm:$0xf]
        %v1254 = vld [vmem:[%s1224 + $0x74] sm:$0xf]
        %v1255 = vld [vmem:[%s1224 + $0x78] sm:$0xf]
        %v1256 = vld [vmem:[%s1224 + $0x7c] sm:$0xf]
        %v1257 = vld [vmem:[%s1224 + $0x80] sm:$0xf]
        %v1258 = vld [vmem:[%s1224 + $0x84] sm:$0xf]
        %v1259 = vld [vmem:[%s1224 + $0x88] sm:$0xf]
        %v1260 = vld [vmem:[%s1224 + $0x8c] sm:$0xf]
        %v1261 = vld [vmem:[%s1224 + $0x90] sm:$0xf]
        %v1262 = vld [vmem:[%s1224 + $0x94] sm:$0xf]
        %v1263 = vld [vmem:[%s1224 + $0x98] sm:$0xf]
        %v1264 = vld [vmem:[%s1224 + $0x9c] sm:$0xf]
        %v1265 = vld [vmem:[%s1224 + $0xa0] sm:$0xf]
        %v1266 = vld [vmem:[%s1224 + $0xa4] sm:$0xf]
        %v1267 = vld [vmem:[%s1224 + $0xa8] sm:$0xf]
        %v1268 = vld [vmem:[%s1224 + $0xac] sm:$0xf]
        %v1269 = vld [vmem:[%s1224 + $0xb0] sm:$0xf]
        %v1270 = vld [vmem:[%s1224 + $0xb4] sm:$0xf]
        %v1271 = vld [vmem:[%s1224 + $0xb8] sm:$0xf]
        %v1272 = vld [vmem:[%s1224 + $0xbc] sm:$0xf]
        %v1277 = vunpack.c.l.b16 %v932
        %v1278 = vunpack.c.h.b16 %v932
        %v1279 = vunpack.c.l.b16 %v933
        %v1280 = vunpack.c.l.b16 %v934
        %v1281 = vunpack.c.h.b16 %v934
        %v1282 = vunpack.c.l.b16 %v935
        %v1283 = vpack.c.b16 %v1280, %v1277
        %v1284 = vpack.c.b16 %v1281, %v1278
        %v1285 = vpack.c.b16 %v1282, %v1279
        %v1337 = vunpack.c.l.b16 %v1225
        %v1338 = vunpack.c.l.b16 %v1226
        %v1339 = vunpack.c.l.b16 %v1227
        %v1340 = vunpack.c.l.b16 %v1228
        %v1341 = vunpack.c.l.b16 %v1229
        %v1342 = vunpack.c.l.b16 %v1230
        %v1343 = vunpack.c.l.b16 %v1231
        %v1344 = vunpack.c.l.b16 %v1232
        %v1345 = vunpack.c.l.b16 %v1233
        %v1346 = vunpack.c.l.b16 %v1234
        %v1347 = vunpack.c.l.b16 %v1235
        %v1348 = vunpack.c.l.b16 %v1236
        %v1349 = vunpack.c.l.b16 %v1237
        %v1350 = vunpack.c.l.b16 %v1238
        %v1351 = vunpack.c.l.b16 %v1239
        %v1352 = vunpack.c.l.b16 %v1240
        %v1353 = vunpack.c.l.b16 %v1241
        %v1354 = vunpack.c.l.b16 %v1242
        %v1355 = vunpack.c.l.b16 %v1243
        %v1356 = vunpack.c.l.b16 %v1244
        %v1357 = vunpack.c.l.b16 %v1245
        %v1358 = vunpack.c.l.b16 %v1246
        %v1359 = vunpack.c.l.b16 %v1247
        %v1360 = vunpack.c.l.b16 %v1248
        %v1361 = vunpack.c.l.b16 %v1249
        %v1362 = vunpack.c.l.b16 %v1250
        %v1363 = vunpack.c.l.b16 %v1251
        %v1364 = vunpack.c.l.b16 %v1252
        %v1365 = vunpack.c.l.b16 %v1253
        %v1366 = vunpack.c.l.b16 %v1254
        %v1367 = vunpack.c.l.b16 %v1255
        %v1368 = vunpack.c.l.b16 %v1256
        %v1369 = vunpack.c.l.b16 %v1257
        %v1370 = vunpack.c.l.b16 %v1258
        %v1371 = vunpack.c.l.b16 %v1259
        %v1372 = vunpack.c.l.b16 %v1260
        %v1373 = vunpack.c.l.b16 %v1261
        %v1374 = vunpack.c.l.b16 %v1262
        %v1375 = vunpack.c.l.b16 %v1263
        %v1376 = vunpack.c.l.b16 %v1264
        %v1377 = vunpack.c.l.b16 %v1265
        %v1378 = vunpack.c.l.b16 %v1266
        %v1379 = vunpack.c.l.b16 %v1267
        %v1380 = vunpack.c.l.b16 %v1268
        %v1381 = vunpack.c.l.b16 %v1269
        %v1382 = vunpack.c.l.b16 %v1270
        %v1383 = vunpack.c.l.b16 %v1271
        %v1384 = vunpack.c.l.b16 %v1272
        %v1385 = vpack.c.b16 %v1338, %v1337
        %v1386 = vpack.c.b16 %v1340, %v1339
        %v1387 = vpack.c.b16 %v1342, %v1341
        %v1388 = vpack.c.b16 %v1344, %v1343
        %v1389 = vpack.c.b16 %v1346, %v1345
        %v1390 = vpack.c.b16 %v1348, %v1347
        %v1391 = vpack.c.b16 %v1350, %v1349
        %v1392 = vpack.c.b16 %v1352, %v1351
        %v1393 = vpack.c.b16 %v1354, %v1353
        %v1394 = vpack.c.b16 %v1356, %v1355
        %v1395 = vpack.c.b16 %v1358, %v1357
        %v1396 = vpack.c.b16 %v1360, %v1359
        %v1397 = vpack.c.b16 %v1362, %v1361
        %v1398 = vpack.c.b16 %v1364, %v1363
        %v1399 = vpack.c.b16 %v1366, %v1365
        %v1400 = vpack.c.b16 %v1368, %v1367
        %v1401 = vpack.c.b16 %v1370, %v1369
        %v1402 = vpack.c.b16 %v1372, %v1371
        %v1403 = vpack.c.b16 %v1374, %v1373
        %v1404 = vpack.c.b16 %v1376, %v1375
        %v1405 = vpack.c.b16 %v1378, %v1377
        %v1406 = vpack.c.b16 %v1380, %v1379
        %v1407 = vpack.c.b16 %v1382, %v1381
        %v1408 = vpack.c.b16 %v1384, %v1383
        %1433 = vmatpush.bf16.msra.mxu0 %v1392
        %1434 = vmatpush.bf16.msra.mxu0 %v1391
        %1435 = vmatpush.bf16.msra.mxu0 %v1390
        %1436 = vmatpush.bf16.msra.mxu0 %v1389
        %1437 = vmatpush.bf16.msra.mxu0 %v1388
        %1438 = vmatpush.bf16.msra.mxu0 %v1387
        %1439 = vmatpush.bf16.msra.mxu0 %v1386
        %1440 = vmatpush.bf16.msra.mxu0 %v1385
        %1441 = vmatmul.bf16.gmra.mxu0 %v1086
        %v1442 = vpop.f32.mrf.mxu0
        %v1443 = vadd.f32 0.0, %v1442
        %v1444 = vpop.f32.mrf.mxu0
        %v1445 = vadd.f32 0.0, %v1444
        %1446 = vmatmul.bf16.gmra.mxu0 %v1089
        %v1447 = vpop.f32.mrf.mxu0
        %v1448 = vadd.f32 0.0, %v1447
        %v1449 = vpop.f32.mrf.mxu0
        %v1450 = vadd.f32 0.0, %v1449
        %1451 = vmatmul.bf16.gmra.mxu0 %v1092
        %v1452 = vpop.f32.mrf.mxu0
        %v1453 = vadd.f32 0.0, %v1452
        %v1454 = vpop.f32.mrf.mxu0
        %v1455 = vadd.f32 0.0, %v1454
        %1456 = vmatmul.bf16.gmra.mxu0 %v1095
        %v1457 = vpop.f32.mrf.mxu0
        %v1458 = vadd.f32 0.0, %v1457
        %v1459 = vpop.f32.mrf.mxu0
        %v1460 = vadd.f32 0.0, %v1459
        %1461 = vmatmul.bf16.gmra.mxu0 %v1098
        %v1462 = vpop.f32.mrf.mxu0
        %v1463 = vadd.f32 0.0, %v1462
        %v1464 = vpop.f32.mrf.mxu0
        %v1465 = vadd.f32 0.0, %v1464
        %1466 = vmatmul.bf16.gmra.mxu0 %v1101
        %v1467 = vpop.f32.mrf.mxu0
        %v1468 = vadd.f32 0.0, %v1467
        %v1469 = vpop.f32.mrf.mxu0
        %v1470 = vadd.f32 0.0, %v1469
        %1471 = vmatmul.bf16.gmra.mxu0 %v1104
        %v1472 = vpop.f32.mrf.mxu0
        %v1473 = vadd.f32 0.0, %v1472
        %v1474 = vpop.f32.mrf.mxu0
        %v1475 = vadd.f32 0.0, %v1474
        %1476 = vmatmul.bf16.gmra.mxu0 %v1107
        %v1477 = vpop.f32.mrf.mxu0
        %v1478 = vadd.f32 0.0, %v1477
        %v1479 = vpop.f32.mrf.mxu0
        %v1480 = vadd.f32 0.0, %v1479
        %1481 = vmatmul.bf16.gmra.mxu0 %v1110
        %v1482 = vpop.f32.mrf.mxu0
        %v1483 = vadd.f32 0.0, %v1482
        %v1484 = vpop.f32.mrf.mxu0
        %v1485 = vadd.f32 0.0, %v1484
        %1486 = vmatmul.bf16.gmra.mxu0 %v1113
        %v1487 = vpop.f32.mrf.mxu0
        %v1488 = vadd.f32 0.0, %v1487
        %v1489 = vpop.f32.mrf.mxu0
        %v1490 = vadd.f32 0.0, %v1489
        %1491 = vmatmul.bf16.gmra.mxu0 %v1116
        %v1492 = vpop.f32.mrf.mxu0
        %v1493 = vadd.f32 0.0, %v1492
        %v1494 = vpop.f32.mrf.mxu0
        %v1495 = vadd.f32 0.0, %v1494
        %1496 = vmatmul.bf16.gmra.mxu0 %v1119
        %v1497 = vpop.f32.mrf.mxu0
        %v1498 = vadd.f32 0.0, %v1497
        %v1499 = vpop.f32.mrf.mxu0
        %v1500 = vadd.f32 0.0, %v1499
        %1501 = vmatmul.bf16.gmra.mxu0 %v1122
        %v1502 = vpop.f32.mrf.mxu0
        %v1503 = vadd.f32 0.0, %v1502
        %v1504 = vpop.f32.mrf.mxu0
        %v1505 = vadd.f32 0.0, %v1504
        %1506 = vmatmul.bf16.gmra.mxu0 %v1125
        %v1507 = vpop.f32.mrf.mxu0
        %v1508 = vadd.f32 0.0, %v1507
        %v1509 = vpop.f32.mrf.mxu0
        %v1510 = vadd.f32 0.0, %v1509
        %1511 = vmatmul.bf16.gmra.mxu0 %v1128
        %v1512 = vpop.f32.mrf.mxu0
        %v1513 = vadd.f32 0.0, %v1512
        %v1514 = vpop.f32.mrf.mxu0
        %v1515 = vadd.f32 0.0, %v1514
        %1516 = vmatmul.bf16.gmra.mxu0 %v1283
        %v1517 = vpop.f32.mrf.mxu0
        %v1518 = vadd.f32 0.0, %v1517
        %v1519 = vpop.f32.mrf.mxu0
        %v1520 = vadd.f32 0.0, %v1519
        %1521 = vdwg.mxu0
        %1522 = vmatpush.bf16.msra.mxu0 %v1400
        %1523 = vmatpush.bf16.msra.mxu0 %v1399
        %1524 = vmatpush.bf16.msra.mxu0 %v1398
        %1525 = vmatpush.bf16.msra.mxu0 %v1397
        %1526 = vmatpush.bf16.msra.mxu0 %v1396
        %1527 = vmatpush.bf16.msra.mxu0 %v1395
        %1528 = vmatpush.bf16.msra.mxu0 %v1394
        %1529 = vmatpush.bf16.msra.mxu0 %v1393
        %1530 = vmatmul.bf16.gmra.mxu0 %v1087
        %v1531 = vpop.f32.mrf.mxu0
        %v1532 = vadd.f32 %v1443, %v1531
        %v1533 = vpop.f32.mrf.mxu0
        %v1534 = vadd.f32 %v1445, %v1533
        %1535 = vmatmul.bf16.gmra.mxu0 %v1090
        %v1536 = vpop.f32.mrf.mxu0
        %v1537 = vadd.f32 %v1448, %v1536
        %v1538 = vpop.f32.mrf.mxu0
        %v1539 = vadd.f32 %v1450, %v1538
        %1540 = vmatmul.bf16.gmra.mxu0 %v1093
        %v1541 = vpop.f32.mrf.mxu0
        %v1542 = vadd.f32 %v1453, %v1541
        %v1543 = vpop.f32.mrf.mxu0
        %v1544 = vadd.f32 %v1455, %v1543
        %1545 = vmatmul.bf16.gmra.mxu0 %v1096
        %v1546 = vpop.f32.mrf.mxu0
        %v1547 = vadd.f32 %v1458, %v1546
        %v1548 = vpop.f32.mrf.mxu0
        %v1549 = vadd.f32 %v1460, %v1548
        %1550 = vmatmul.bf16.gmra.mxu0 %v1099
        %v1551 = vpop.f32.mrf.mxu0
        %v1552 = vadd.f32 %v1463, %v1551
        %v1553 = vpop.f32.mrf.mxu0
        %v1554 = vadd.f32 %v1465, %v1553
        %1555 = vmatmul.bf16.gmra.mxu0 %v1102
        %v1556 = vpop.f32.mrf.mxu0
        %v1557 = vadd.f32 %v1468, %v1556
        %v1558 = vpop.f32.mrf.mxu0
        %v1559 = vadd.f32 %v1470, %v1558
        %1560 = vmatmul.bf16.gmra.mxu0 %v1105
        %v1561 = vpop.f32.mrf.mxu0
        %v1562 = vadd.f32 %v1473, %v1561
        %v1563 = vpop.f32.mrf.mxu0
        %v1564 = vadd.f32 %v1475, %v1563
        %1565 = vmatmul.bf16.gmra.mxu0 %v1108
        %v1566 = vpop.f32.mrf.mxu0
        %v1567 = vadd.f32 %v1478, %v1566
        %v1568 = vpop.f32.mrf.mxu0
        %v1569 = vadd.f32 %v1480, %v1568
        %1570 = vmatmul.bf16.gmra.mxu0 %v1111
        %v1571 = vpop.f32.mrf.mxu0
        %v1572 = vadd.f32 %v1483, %v1571
        %v1573 = vpop.f32.mrf.mxu0
        %v1574 = vadd.f32 %v1485, %v1573
        %1575 = vmatmul.bf16.gmra.mxu0 %v1114
        %v1576 = vpop.f32.mrf.mxu0
        %v1577 = vadd.f32 %v1488, %v1576
        %v1578 = vpop.f32.mrf.mxu0
        %v1579 = vadd.f32 %v1490, %v1578
        %1580 = vmatmul.bf16.gmra.mxu0 %v1117
        %v1581 = vpop.f32.mrf.mxu0
        %v1582 = vadd.f32 %v1493, %v1581
        %v1583 = vpop.f32.mrf.mxu0
        %v1584 = vadd.f32 %v1495, %v1583
        %1585 = vmatmul.bf16.gmra.mxu0 %v1120
        %v1586 = vpop.f32.mrf.mxu0
        %v1587 = vadd.f32 %v1498, %v1586
        %v1588 = vpop.f32.mrf.mxu0
        %v1589 = vadd.f32 %v1500, %v1588
        %1590 = vmatmul.bf16.gmra.mxu0 %v1123
        %v1591 = vpop.f32.mrf.mxu0
        %v1592 = vadd.f32 %v1503, %v1591
        %v1593 = vpop.f32.mrf.mxu0
        %v1594 = vadd.f32 %v1505, %v1593
        %1595 = vmatmul.bf16.gmra.mxu0 %v1126
        %v1596 = vpop.f32.mrf.mxu0
        %v1597 = vadd.f32 %v1508, %v1596
        %v1598 = vpop.f32.mrf.mxu0
        %v1599 = vadd.f32 %v1510, %v1598
        %1600 = vmatmul.bf16.gmra.mxu0 %v1129
        %v1601 = vpop.f32.mrf.mxu0
        %v1602 = vadd.f32 %v1513, %v1601
        %v1603 = vpop.f32.mrf.mxu0
        %v1604 = vadd.f32 %v1515, %v1603
        %1605 = vmatmul.bf16.gmra.mxu0 %v1284
        %v1606 = vpop.f32.mrf.mxu0
        %v1607 = vadd.f32 %v1518, %v1606
        %v1608 = vpop.f32.mrf.mxu0
        %v1609 = vadd.f32 %v1520, %v1608
        %1610 = vdwg.mxu0
        %1611 = vmatpush.bf16.msra.mxu0 %v1408
        %1612 = vmatpush.bf16.msra.mxu0 %v1407
        %1613 = vmatpush.bf16.msra.mxu0 %v1406
        %1614 = vmatpush.bf16.msra.mxu0 %v1405
        %1615 = vmatpush.bf16.msra.mxu0 %v1404
        %1616 = vmatpush.bf16.msra.mxu0 %v1403
        %1617 = vmatpush.bf16.msra.mxu0 %v1402
        %1618 = vmatpush.bf16.msra.mxu0 %v1401
        %1619 = vmatmul.bf16.gmra.mxu0 %v1088
        %v1620 = vpop.f32.mrf.mxu0
        %v1621 = vadd.f32 %v1532, %v1620
        %v1622 = vpop.f32.mrf.mxu0
        %v1623 = vadd.f32 %v1534, %v1622
        %1624 = vmatmul.bf16.gmra.mxu0 %v1091
        %v1625 = vpop.f32.mrf.mxu0
        %v1626 = vadd.f32 %v1537, %v1625
        %v1627 = vpop.f32.mrf.mxu0
        %v1628 = vadd.f32 %v1539, %v1627
        %1629 = vmatmul.bf16.gmra.mxu0 %v1094
        %v1630 = vpop.f32.mrf.mxu0
        %v1631 = vadd.f32 %v1542, %v1630
        %v1632 = vpop.f32.mrf.mxu0
        %v1633 = vadd.f32 %v1544, %v1632
        %1634 = vmatmul.bf16.gmra.mxu0 %v1097
        %v1635 = vpop.f32.mrf.mxu0
        %v1636 = vadd.f32 %v1547, %v1635
        %v1637 = vpop.f32.mrf.mxu0
        %v1638 = vadd.f32 %v1549, %v1637
        %1639 = vmatmul.bf16.gmra.mxu0 %v1100
        %v1640 = vpop.f32.mrf.mxu0
        %v1641 = vadd.f32 %v1552, %v1640
        %v1642 = vpop.f32.mrf.mxu0
        %v1643 = vadd.f32 %v1554, %v1642
        %1644 = vmatmul.bf16.gmra.mxu0 %v1103
        %v1645 = vpop.f32.mrf.mxu0
        %v1646 = vadd.f32 %v1557, %v1645
        %v1647 = vpop.f32.mrf.mxu0
        %v1648 = vadd.f32 %v1559, %v1647
        %1649 = vmatmul.bf16.gmra.mxu0 %v1106
        %v1650 = vpop.f32.mrf.mxu0
        %v1651 = vadd.f32 %v1562, %v1650
        %v1652 = vpop.f32.mrf.mxu0
        %v1653 = vadd.f32 %v1564, %v1652
        %1654 = vmatmul.bf16.gmra.mxu0 %v1109
        %v1655 = vpop.f32.mrf.mxu0
        %v1656 = vadd.f32 %v1567, %v1655
        %v1657 = vpop.f32.mrf.mxu0
        %v1658 = vadd.f32 %v1569, %v1657
        %1659 = vmatmul.bf16.gmra.mxu0 %v1112
        %v1660 = vpop.f32.mrf.mxu0
        %v1661 = vadd.f32 %v1572, %v1660
        %v1662 = vpop.f32.mrf.mxu0
        %v1663 = vadd.f32 %v1574, %v1662
        %1664 = vmatmul.bf16.gmra.mxu0 %v1115
        %v1665 = vpop.f32.mrf.mxu0
        %v1666 = vadd.f32 %v1577, %v1665
        %v1667 = vpop.f32.mrf.mxu0
        %v1668 = vadd.f32 %v1579, %v1667
        %1669 = vmatmul.bf16.gmra.mxu0 %v1118
        %v1670 = vpop.f32.mrf.mxu0
        %v1671 = vadd.f32 %v1582, %v1670
        %v1672 = vpop.f32.mrf.mxu0
        %v1673 = vadd.f32 %v1584, %v1672
        %1674 = vmatmul.bf16.gmra.mxu0 %v1121
        %v1675 = vpop.f32.mrf.mxu0
        %v1676 = vadd.f32 %v1587, %v1675
        %v1677 = vpop.f32.mrf.mxu0
        %v1678 = vadd.f32 %v1589, %v1677
        %1679 = vmatmul.bf16.gmra.mxu0 %v1124
        %v1680 = vpop.f32.mrf.mxu0
        %v1681 = vadd.f32 %v1592, %v1680
        %v1682 = vpop.f32.mrf.mxu0
        %v1683 = vadd.f32 %v1594, %v1682
        %1684 = vmatmul.bf16.gmra.mxu0 %v1127
        %v1685 = vpop.f32.mrf.mxu0
        %v1686 = vadd.f32 %v1597, %v1685
        %v1687 = vpop.f32.mrf.mxu0
        %v1688 = vadd.f32 %v1599, %v1687
        %1689 = vmatmul.bf16.gmra.mxu0 %v1130
        %v1690 = vpop.f32.mrf.mxu0
        %v1691 = vadd.f32 %v1602, %v1690
        %v1692 = vpop.f32.mrf.mxu0
        %v1693 = vadd.f32 %v1604, %v1692
        %1694 = vmatmul.bf16.gmra.mxu0 %v1285
        %v1695 = vpop.f32.mrf.mxu0
        %v1696 = vadd.f32 %v1607, %v1695
        %v1697 = vpop.f32.mrf.mxu0
        %v1698 = vadd.f32 %v1609, %v1697
        %1699 = vdwg.mxu0
        %v1748 = vunpack.c.l.b16 %v1176
        %v1749 = vunpack.c.l.b16 %v1177
        %v1750 = vunpack.c.l.b16 %v1178
        %v1751 = vunpack.c.l.b16 %v1179
        %v1752 = vunpack.c.l.b16 %v1180
        %v1753 = vunpack.c.l.b16 %v1181
        %v1754 = vunpack.c.l.b16 %v1182
        %v1755 = vunpack.c.l.b16 %v1183
        %v1756 = vunpack.c.l.b16 %v1184
        %v1757 = vunpack.c.l.b16 %v1185
        %v1758 = vunpack.c.l.b16 %v1186
        %v1759 = vunpack.c.l.b16 %v1187
        %v1760 = vunpack.c.l.b16 %v1188
        %v1761 = vunpack.c.l.b16 %v1189
        %v1762 = vunpack.c.l.b16 %v1190
        %v1763 = vunpack.c.l.b16 %v1191
        %v1764 = vunpack.c.l.b16 %v1192
        %v1765 = vunpack.c.l.b16 %v1193
        %v1766 = vunpack.c.l.b16 %v1194
        %v1767 = vunpack.c.l.b16 %v1195
        %v1768 = vunpack.c.l.b16 %v1196
        %v1769 = vunpack.c.l.b16 %v1197
        %v1770 = vunpack.c.l.b16 %v1198
        %v1771 = vunpack.c.l.b16 %v1199
        %v1772 = vunpack.c.l.b16 %v1200
        %v1773 = vunpack.c.l.b16 %v1201
        %v1774 = vunpack.c.l.b16 %v1202
        %v1775 = vunpack.c.l.b16 %v1203
        %v1776 = vunpack.c.l.b16 %v1204
        %v1777 = vunpack.c.l.b16 %v1205
        %v1778 = vunpack.c.l.b16 %v1206
        %v1779 = vunpack.c.l.b16 %v1207
        %v1780 = vunpack.c.l.b16 %v1208
        %v1781 = vunpack.c.l.b16 %v1209
        %v1782 = vunpack.c.l.b16 %v1210
        %v1783 = vunpack.c.l.b16 %v1211
        %v1784 = vunpack.c.l.b16 %v1212
        %v1785 = vunpack.c.l.b16 %v1213
        %v1786 = vunpack.c.l.b16 %v1214
        %v1787 = vunpack.c.l.b16 %v1215
        %v1788 = vunpack.c.l.b16 %v1216
        %v1789 = vunpack.c.l.b16 %v1217
        %v1790 = vunpack.c.l.b16 %v1218
        %v1791 = vunpack.c.l.b16 %v1219
        %v1792 = vunpack.c.l.b16 %v1220
        %v1793 = vunpack.c.l.b16 %v1221
        %v1794 = vunpack.c.l.b16 %v1222
        %v1795 = vunpack.c.l.b16 %v1223
        %v1796 = vpack.c.b16 %v1749, %v1748
        %v1797 = vpack.c.b16 %v1751, %v1750
        %v1798 = vpack.c.b16 %v1753, %v1752
        %v1799 = vpack.c.b16 %v1755, %v1754
        %v1800 = vpack.c.b16 %v1757, %v1756
        %v1801 = vpack.c.b16 %v1759, %v1758
        %v1802 = vpack.c.b16 %v1761, %v1760
        %v1803 = vpack.c.b16 %v1763, %v1762
        %v1804 = vpack.c.b16 %v1765, %v1764
        %v1805 = vpack.c.b16 %v1767, %v1766
        %v1806 = vpack.c.b16 %v1769, %v1768
        %v1807 = vpack.c.b16 %v1771, %v1770
        %v1808 = vpack.c.b16 %v1773, %v1772
        %v1809 = vpack.c.b16 %v1775, %v1774
        %v1810 = vpack.c.b16 %v1777, %v1776
        %v1811 = vpack.c.b16 %v1779, %v1778
        %v1812 = vpack.c.b16 %v1781, %v1780
        %v1813 = vpack.c.b16 %v1783, %v1782
        %v1814 = vpack.c.b16 %v1785, %v1784
        %v1815 = vpack.c.b16 %v1787, %v1786
        %v1816 = vpack.c.b16 %v1789, %v1788
        %v1817 = vpack.c.b16 %v1791, %v1790
        %v1818 = vpack.c.b16 %v1793, %v1792
        %v1819 = vpack.c.b16 %v1795, %v1794
        %1844 = vmatpush.bf16.msra.mxu0 %v1803
        %1845 = vmatpush.bf16.msra.mxu0 %v1802
        %1846 = vmatpush.bf16.msra.mxu0 %v1801
        %1847 = vmatpush.bf16.msra.mxu0 %v1800
        %1848 = vmatpush.bf16.msra.mxu0 %v1799
        %1849 = vmatpush.bf16.msra.mxu0 %v1798
        %1850 = vmatpush.bf16.msra.mxu0 %v1797
        %1851 = vmatpush.bf16.msra.mxu0 %v1796
        %1852 = vmatmul.bf16.gmra.mxu0 0
        %v1853 = vpop.f32.mrf.mxu0
        %v1854 = vadd.f32 %v1621, %v1853
        %v1855 = vpop.f32.mrf.mxu0
        %v1856 = vadd.f32 %v1623, %v1855
        %1857 = vmatmul.bf16.gmra.mxu0 %v1086
        %v1858 = vpop.f32.mrf.mxu0
        %v1859 = vadd.f32 %v1626, %v1858
        %v1860 = vpop.f32.mrf.mxu0
        %v1861 = vadd.f32 %v1628, %v1860
        %1862 = vmatmul.bf16.gmra.mxu0 %v1089
        %v1863 = vpop.f32.mrf.mxu0
        %v1864 = vadd.f32 %v1631, %v1863
        %v1865 = vpop.f32.mrf.mxu0
        %v1866 = vadd.f32 %v1633, %v1865
        %1867 = vmatmul.bf16.gmra.mxu0 %v1092
        %v1868 = vpop.f32.mrf.mxu0
        %v1869 = vadd.f32 %v1636, %v1868
        %v1870 = vpop.f32.mrf.mxu0
        %v1871 = vadd.f32 %v1638, %v1870
        %1872 = vmatmul.bf16.gmra.mxu0 %v1095
        %v1873 = vpop.f32.mrf.mxu0
        %v1874 = vadd.f32 %v1641, %v1873
        %v1875 = vpop.f32.mrf.mxu0
        %v1876 = vadd.f32 %v1643, %v1875
        %1877 = vmatmul.bf16.gmra.mxu0 %v1098
        %v1878 = vpop.f32.mrf.mxu0
        %v1879 = vadd.f32 %v1646, %v1878
        %v1880 = vpop.f32.mrf.mxu0
        %v1881 = vadd.f32 %v1648, %v1880
        %1882 = vmatmul.bf16.gmra.mxu0 %v1101
        %v1883 = vpop.f32.mrf.mxu0
        %v1884 = vadd.f32 %v1651, %v1883
        %v1885 = vpop.f32.mrf.mxu0
        %v1886 = vadd.f32 %v1653, %v1885
        %1887 = vmatmul.bf16.gmra.mxu0 %v1104
        %v1888 = vpop.f32.mrf.mxu0
        %v1889 = vadd.f32 %v1656, %v1888
        %v1890 = vpop.f32.mrf.mxu0
        %v1891 = vadd.f32 %v1658, %v1890
        %1892 = vmatmul.bf16.gmra.mxu0 %v1107
        %v1893 = vpop.f32.mrf.mxu0
        %v1894 = vadd.f32 %v1661, %v1893
        %v1895 = vpop.f32.mrf.mxu0
        %v1896 = vadd.f32 %v1663, %v1895
        %1897 = vmatmul.bf16.gmra.mxu0 %v1110
        %v1898 = vpop.f32.mrf.mxu0
        %v1899 = vadd.f32 %v1666, %v1898
        %v1900 = vpop.f32.mrf.mxu0
        %v1901 = vadd.f32 %v1668, %v1900
        %1902 = vmatmul.bf16.gmra.mxu0 %v1113
        %v1903 = vpop.f32.mrf.mxu0
        %v1904 = vadd.f32 %v1671, %v1903
        %v1905 = vpop.f32.mrf.mxu0
        %v1906 = vadd.f32 %v1673, %v1905
        %1907 = vmatmul.bf16.gmra.mxu0 %v1116
        %v1908 = vpop.f32.mrf.mxu0
        %v1909 = vadd.f32 %v1676, %v1908
        %v1910 = vpop.f32.mrf.mxu0
        %v1911 = vadd.f32 %v1678, %v1910
        %1912 = vmatmul.bf16.gmra.mxu0 %v1119
        %v1913 = vpop.f32.mrf.mxu0
        %v1914 = vadd.f32 %v1681, %v1913
        %v1915 = vpop.f32.mrf.mxu0
        %v1916 = vadd.f32 %v1683, %v1915
        %1917 = vmatmul.bf16.gmra.mxu0 %v1122
        %v1918 = vpop.f32.mrf.mxu0
        %v1919 = vadd.f32 %v1686, %v1918
        %v1920 = vpop.f32.mrf.mxu0
        %v1921 = vadd.f32 %v1688, %v1920
        %1922 = vmatmul.bf16.gmra.mxu0 %v1125
        %v1923 = vpop.f32.mrf.mxu0
        %v1924 = vadd.f32 %v1691, %v1923
        %v1925 = vpop.f32.mrf.mxu0
        %v1926 = vadd.f32 %v1693, %v1925
        %1927 = vmatmul.bf16.gmra.mxu0 %v1128
        %v1928 = vpop.f32.mrf.mxu0
        %v1929 = vadd.f32 %v1696, %v1928
        %v1930 = vpop.f32.mrf.mxu0
        %v1931 = vadd.f32 %v1698, %v1930
        %1932 = vdwg.mxu0
        %1933 = vmatpush.bf16.msra.mxu0 %v1811
        %1934 = vmatpush.bf16.msra.mxu0 %v1810
        %1935 = vmatpush.bf16.msra.mxu0 %v1809
        %1936 = vmatpush.bf16.msra.mxu0 %v1808
        %1937 = vmatpush.bf16.msra.mxu0 %v1807
        %1938 = vmatpush.bf16.msra.mxu0 %v1806
        %1939 = vmatpush.bf16.msra.mxu0 %v1805
        %1940 = vmatpush.bf16.msra.mxu0 %v1804
        %1941 = vmatmul.bf16.gmra.mxu0 0
        %v1942 = vpop.f32.mrf.mxu0
        %v1943 = vadd.f32 %v1854, %v1942
        %v1944 = vpop.f32.mrf.mxu0
        %v1945 = vadd.f32 %v1856, %v1944
        %1946 = vmatmul.bf16.gmra.mxu0 %v1087
        %v1947 = vpop.f32.mrf.mxu0
        %v1948 = vadd.f32 %v1859, %v1947
        %v1949 = vpop.f32.mrf.mxu0
        %v1950 = vadd.f32 %v1861, %v1949
        %1951 = vmatmul.bf16.gmra.mxu0 %v1090
        %v1952 = vpop.f32.mrf.mxu0
        %v1953 = vadd.f32 %v1864, %v1952
        %v1954 = vpop.f32.mrf.mxu0
        %v1955 = vadd.f32 %v1866, %v1954
        %1956 = vmatmul.bf16.gmra.mxu0 %v1093
        %v1957 = vpop.f32.mrf.mxu0
        %v1958 = vadd.f32 %v1869, %v1957
        %v1959 = vpop.f32.mrf.mxu0
        %v1960 = vadd.f32 %v1871, %v1959
        %1961 = vmatmul.bf16.gmra.mxu0 %v1096
        %v1962 = vpop.f32.mrf.mxu0
        %v1963 = vadd.f32 %v1874, %v1962
        %v1964 = vpop.f32.mrf.mxu0
        %v1965 = vadd.f32 %v1876, %v1964
        %1966 = vmatmul.bf16.gmra.mxu0 %v1099
        %v1967 = vpop.f32.mrf.mxu0
        %v1968 = vadd.f32 %v1879, %v1967
        %v1969 = vpop.f32.mrf.mxu0
        %v1970 = vadd.f32 %v1881, %v1969
        %1971 = vmatmul.bf16.gmra.mxu0 %v1102
        %v1972 = vpop.f32.mrf.mxu0
        %v1973 = vadd.f32 %v1884, %v1972
        %v1974 = vpop.f32.mrf.mxu0
        %v1975 = vadd.f32 %v1886, %v1974
        %1976 = vmatmul.bf16.gmra.mxu0 %v1105
        %v1977 = vpop.f32.mrf.mxu0
        %v1978 = vadd.f32 %v1889, %v1977
        %v1979 = vpop.f32.mrf.mxu0
        %v1980 = vadd.f32 %v1891, %v1979
        %1981 = vmatmul.bf16.gmra.mxu0 %v1108
        %v1982 = vpop.f32.mrf.mxu0
        %v1983 = vadd.f32 %v1894, %v1982
        %v1984 = vpop.f32.mrf.mxu0
        %v1985 = vadd.f32 %v1896, %v1984
        %1986 = vmatmul.bf16.gmra.mxu0 %v1111
        %v1987 = vpop.f32.mrf.mxu0
        %v1988 = vadd.f32 %v1899, %v1987
        %v1989 = vpop.f32.mrf.mxu0
        %v1990 = vadd.f32 %v1901, %v1989
        %1991 = vmatmul.bf16.gmra.mxu0 %v1114
        %v1992 = vpop.f32.mrf.mxu0
        %v1993 = vadd.f32 %v1904, %v1992
        %v1994 = vpop.f32.mrf.mxu0
        %v1995 = vadd.f32 %v1906, %v1994
        %1996 = vmatmul.bf16.gmra.mxu0 %v1117
        %v1997 = vpop.f32.mrf.mxu0
        %v1998 = vadd.f32 %v1909, %v1997
        %v1999 = vpop.f32.mrf.mxu0
        %v2000 = vadd.f32 %v1911, %v1999
        %2001 = vmatmul.bf16.gmra.mxu0 %v1120
        %v2002 = vpop.f32.mrf.mxu0
        %v2003 = vadd.f32 %v1914, %v2002
        %v2004 = vpop.f32.mrf.mxu0
        %v2005 = vadd.f32 %v1916, %v2004
        %2006 = vmatmul.bf16.gmra.mxu0 %v1123
        %v2007 = vpop.f32.mrf.mxu0
        %v2008 = vadd.f32 %v1919, %v2007
        %v2009 = vpop.f32.mrf.mxu0
        %v2010 = vadd.f32 %v1921, %v2009
        %2011 = vmatmul.bf16.gmra.mxu0 %v1126
        %v2012 = vpop.f32.mrf.mxu0
        %v2013 = vadd.f32 %v1924, %v2012
        %v2014 = vpop.f32.mrf.mxu0
        %v2015 = vadd.f32 %v1926, %v2014
        %2016 = vmatmul.bf16.gmra.mxu0 %v1129
        %v2017 = vpop.f32.mrf.mxu0
        %v2018 = vadd.f32 %v1929, %v2017
        %v2019 = vpop.f32.mrf.mxu0
        %v2020 = vadd.f32 %v1931, %v2019
        %2021 = vdwg.mxu0
        %2022 = vmatpush.bf16.msra.mxu0 %v1819
        %2023 = vmatpush.bf16.msra.mxu0 %v1818
        %2024 = vmatpush.bf16.msra.mxu0 %v1817
        %2025 = vmatpush.bf16.msra.mxu0 %v1816
        %2026 = vmatpush.bf16.msra.mxu0 %v1815
        %2027 = vmatpush.bf16.msra.mxu0 %v1814
        %2028 = vmatpush.bf16.msra.mxu0 %v1813
        %2029 = vmatpush.bf16.msra.mxu0 %v1812
        %2030 = vmatmul.bf16.gmra.mxu0 0
        %v2031 = vpop.f32.mrf.mxu0
        %v2032 = vadd.f32 %v1943, %v2031
        %v2033 = vpop.f32.mrf.mxu0
        %v2034 = vadd.f32 %v1945, %v2033
        %2035 = vmatmul.bf16.gmra.mxu0 %v1088
        %v2036 = vpop.f32.mrf.mxu0
        %v2037 = vadd.f32 %v1948, %v2036
        %v2038 = vpop.f32.mrf.mxu0
        %v2039 = vadd.f32 %v1950, %v2038
        %2040 = vmatmul.bf16.gmra.mxu0 %v1091
        %v2041 = vpop.f32.mrf.mxu0
        %v2042 = vadd.f32 %v1953, %v2041
        %v2043 = vpop.f32.mrf.mxu0
        %v2044 = vadd.f32 %v1955, %v2043
        %2045 = vmatmul.bf16.gmra.mxu0 %v1094
        %v2046 = vpop.f32.mrf.mxu0
        %v2047 = vadd.f32 %v1958, %v2046
        %v2048 = vpop.f32.mrf.mxu0
        %v2049 = vadd.f32 %v1960, %v2048
        %2050 = vmatmul.bf16.gmra.mxu0 %v1097
        %v2051 = vpop.f32.mrf.mxu0
        %v2052 = vadd.f32 %v1963, %v2051
        %v2053 = vpop.f32.mrf.mxu0
        %v2054 = vadd.f32 %v1965, %v2053
        %2055 = vmatmul.bf16.gmra.mxu0 %v1100
        %v2056 = vpop.f32.mrf.mxu0
        %v2057 = vadd.f32 %v1968, %v2056
        %v2058 = vpop.f32.mrf.mxu0
        %v2059 = vadd.f32 %v1970, %v2058
        %2060 = vmatmul.bf16.gmra.mxu0 %v1103
        %v2061 = vpop.f32.mrf.mxu0
        %v2062 = vadd.f32 %v1973, %v2061
        %v2063 = vpop.f32.mrf.mxu0
        %v2064 = vadd.f32 %v1975, %v2063
        %2065 = vmatmul.bf16.gmra.mxu0 %v1106
        %v2066 = vpop.f32.mrf.mxu0
        %v2067 = vadd.f32 %v1978, %v2066
        %v2068 = vpop.f32.mrf.mxu0
        %v2069 = vadd.f32 %v1980, %v2068
        %2070 = vmatmul.bf16.gmra.mxu0 %v1109
        %v2071 = vpop.f32.mrf.mxu0
        %v2072 = vadd.f32 %v1983, %v2071
        %v2073 = vpop.f32.mrf.mxu0
        %v2074 = vadd.f32 %v1985, %v2073
        %2075 = vmatmul.bf16.gmra.mxu0 %v1112
        %v2076 = vpop.f32.mrf.mxu0
        %v2077 = vadd.f32 %v1988, %v2076
        %v2078 = vpop.f32.mrf.mxu0
        %v2079 = vadd.f32 %v1990, %v2078
        %2080 = vmatmul.bf16.gmra.mxu0 %v1115
        %v2081 = vpop.f32.mrf.mxu0
        %v2082 = vadd.f32 %v1993, %v2081
        %v2083 = vpop.f32.mrf.mxu0
        %v2084 = vadd.f32 %v1995, %v2083
        %2085 = vmatmul.bf16.gmra.mxu0 %v1118
        %v2086 = vpop.f32.mrf.mxu0
        %v2087 = vadd.f32 %v1998, %v2086
        %v2088 = vpop.f32.mrf.mxu0
        %v2089 = vadd.f32 %v2000, %v2088
        %2090 = vmatmul.bf16.gmra.mxu0 %v1121
        %v2091 = vpop.f32.mrf.mxu0
        %v2092 = vadd.f32 %v2003, %v2091
        %v2093 = vpop.f32.mrf.mxu0
        %v2094 = vadd.f32 %v2005, %v2093
        %2095 = vmatmul.bf16.gmra.mxu0 %v1124
        %v2096 = vpop.f32.mrf.mxu0
        %v2097 = vadd.f32 %v2008, %v2096
        %v2098 = vpop.f32.mrf.mxu0
        %v2099 = vadd.f32 %v2010, %v2098
        %2100 = vmatmul.bf16.gmra.mxu0 %v1127
        %v2101 = vpop.f32.mrf.mxu0
        %v2102 = vadd.f32 %v2013, %v2101
        %v2103 = vpop.f32.mrf.mxu0
        %v2104 = vadd.f32 %v2015, %v2103
        %2105 = vmatmul.bf16.gmra.mxu0 %v1130
        %v2106 = vpop.f32.mrf.mxu0
        %v2107 = vadd.f32 %v2018, %v2106
        %v2108 = vpop.f32.mrf.mxu0
        %v2109 = vadd.f32 %v2020, %v2108
        %2110 = vdwg.mxu0
        %s2111 = scalar_lea.vmem %s3, 384
        %v2112 = vld [vmem:[%s2111] sm:$0xf]
        %v2113 = vld [vmem:[%s2111 + $0x4] sm:$0xf]
        %v2114 = vld [vmem:[%s2111 + $0x8] sm:$0xf]
        %v2115 = vld [vmem:[%s2111 + $0xc] sm:$0xf]
        %v2116 = vld [vmem:[%s2111 + $0x10] sm:$0xf]
        %v2117 = vld [vmem:[%s2111 + $0x14] sm:$0xf]
        %v2118 = vld [vmem:[%s2111 + $0x18] sm:$0xf]
        %v2119 = vld [vmem:[%s2111 + $0x1c] sm:$0xf]
        %v2120 = vld [vmem:[%s2111 + $0x20] sm:$0xf]
        %v2121 = vld [vmem:[%s2111 + $0x24] sm:$0xf]
        %v2122 = vld [vmem:[%s2111 + $0x28] sm:$0xf]
        %v2123 = vld [vmem:[%s2111 + $0x2c] sm:$0xf]
        %v2124 = vld [vmem:[%s2111 + $0x30] sm:$0xf]
        %v2125 = vld [vmem:[%s2111 + $0x34] sm:$0xf]
        %v2126 = vld [vmem:[%s2111 + $0x38] sm:$0xf]
        %v2127 = vld [vmem:[%s2111 + $0x3c] sm:$0xf]
        %v2128 = vld [vmem:[%s2111 + $0x40] sm:$0xf]
        %v2129 = vld [vmem:[%s2111 + $0x44] sm:$0xf]
        %v2130 = vld [vmem:[%s2111 + $0x48] sm:$0xf]
        %v2131 = vld [vmem:[%s2111 + $0x4c] sm:$0xf]
        %v2132 = vld [vmem:[%s2111 + $0x50] sm:$0xf]
        %v2133 = vld [vmem:[%s2111 + $0x54] sm:$0xf]
        %v2134 = vld [vmem:[%s2111 + $0x58] sm:$0xf]
        %v2135 = vld [vmem:[%s2111 + $0x5c] sm:$0xf]
        %v2136 = vld [vmem:[%s2111 + $0x60] sm:$0xf]
        %v2137 = vld [vmem:[%s2111 + $0x64] sm:$0xf]
        %v2138 = vld [vmem:[%s2111 + $0x68] sm:$0xf]
        %v2139 = vld [vmem:[%s2111 + $0x6c] sm:$0xf]
        %v2140 = vld [vmem:[%s2111 + $0x70] sm:$0xf]
        %v2141 = vld [vmem:[%s2111 + $0x74] sm:$0xf]
        %v2142 = vld [vmem:[%s2111 + $0x78] sm:$0xf]
        %v2143 = vld [vmem:[%s2111 + $0x7c] sm:$0xf]
        %v2144 = vld [vmem:[%s2111 + $0x80] sm:$0xf]
        %v2145 = vld [vmem:[%s2111 + $0x84] sm:$0xf]
        %v2146 = vld [vmem:[%s2111 + $0x88] sm:$0xf]
        %v2147 = vld [vmem:[%s2111 + $0x8c] sm:$0xf]
        %v2148 = vld [vmem:[%s2111 + $0x90] sm:$0xf]
        %v2149 = vld [vmem:[%s2111 + $0x94] sm:$0xf]
        %v2150 = vld [vmem:[%s2111 + $0x98] sm:$0xf]
        %v2151 = vld [vmem:[%s2111 + $0x9c] sm:$0xf]
        %v2152 = vld [vmem:[%s2111 + $0xa0] sm:$0xf]
        %v2153 = vld [vmem:[%s2111 + $0xa4] sm:$0xf]
        %v2154 = vld [vmem:[%s2111 + $0xa8] sm:$0xf]
        %v2155 = vld [vmem:[%s2111 + $0xac] sm:$0xf]
        %v2156 = vld [vmem:[%s2111 + $0xb0] sm:$0xf]
        %v2157 = vld [vmem:[%s2111 + $0xb4] sm:$0xf]
        %v2158 = vld [vmem:[%s2111 + $0xb8] sm:$0xf]
        %v2159 = vld [vmem:[%s2111 + $0xbc] sm:$0xf]
        %v2161 = vunpack.c.l.b16 0
        %v2162 = vunpack.c.h.b16 0
        %v2163 = vpack.c.b16 %v2161, %v2161
        %v2164 = vpack.c.b16 %v2162, %v2162
        %v2215 = vunpack.c.l.b16 %v2112
        %v2216 = vunpack.c.l.b16 %v2113
        %v2217 = vunpack.c.l.b16 %v2114
        %v2218 = vunpack.c.l.b16 %v2115
        %v2219 = vunpack.c.l.b16 %v2116
        %v2220 = vunpack.c.l.b16 %v2117
        %v2221 = vunpack.c.l.b16 %v2118
        %v2222 = vunpack.c.l.b16 %v2119
        %v2223 = vunpack.c.l.b16 %v2120
        %v2224 = vunpack.c.l.b16 %v2121
        %v2225 = vunpack.c.l.b16 %v2122
        %v2226 = vunpack.c.l.b16 %v2123
        %v2227 = vunpack.c.l.b16 %v2124
        %v2228 = vunpack.c.l.b16 %v2125
        %v2229 = vunpack.c.l.b16 %v2126
        %v2230 = vunpack.c.l.b16 %v2127
        %v2231 = vunpack.c.l.b16 %v2128
        %v2232 = vunpack.c.l.b16 %v2129
        %v2233 = vunpack.c.l.b16 %v2130
        %v2234 = vunpack.c.l.b16 %v2131
        %v2235 = vunpack.c.l.b16 %v2132
        %v2236 = vunpack.c.l.b16 %v2133
        %v2237 = vunpack.c.l.b16 %v2134
        %v2238 = vunpack.c.l.b16 %v2135
        %v2239 = vunpack.c.l.b16 %v2136
        %v2240 = vunpack.c.l.b16 %v2137
        %v2241 = vunpack.c.l.b16 %v2138
        %v2242 = vunpack.c.l.b16 %v2139
        %v2243 = vunpack.c.l.b16 %v2140
        %v2244 = vunpack.c.l.b16 %v2141
        %v2245 = vunpack.c.l.b16 %v2142
        %v2246 = vunpack.c.l.b16 %v2143
        %v2247 = vunpack.c.l.b16 %v2144
        %v2248 = vunpack.c.l.b16 %v2145
        %v2249 = vunpack.c.l.b16 %v2146
        %v2250 = vunpack.c.l.b16 %v2147
        %v2251 = vunpack.c.l.b16 %v2148
        %v2252 = vunpack.c.l.b16 %v2149
        %v2253 = vunpack.c.l.b16 %v2150
        %v2254 = vunpack.c.l.b16 %v2151
        %v2255 = vunpack.c.l.b16 %v2152
        %v2256 = vunpack.c.l.b16 %v2153
        %v2257 = vunpack.c.l.b16 %v2154
        %v2258 = vunpack.c.l.b16 %v2155
        %v2259 = vunpack.c.l.b16 %v2156
        %v2260 = vunpack.c.l.b16 %v2157
        %v2261 = vunpack.c.l.b16 %v2158
        %v2262 = vunpack.c.l.b16 %v2159
        %v2263 = vpack.c.b16 %v2216, %v2215
        %v2264 = vpack.c.b16 %v2218, %v2217
        %v2265 = vpack.c.b16 %v2220, %v2219
        %v2266 = vpack.c.b16 %v2222, %v2221
        %v2267 = vpack.c.b16 %v2224, %v2223
        %v2268 = vpack.c.b16 %v2226, %v2225
        %v2269 = vpack.c.b16 %v2228, %v2227
        %v2270 = vpack.c.b16 %v2230, %v2229
        %v2271 = vpack.c.b16 %v2232, %v2231
        %v2272 = vpack.c.b16 %v2234, %v2233
        %v2273 = vpack.c.b16 %v2236, %v2235
        %v2274 = vpack.c.b16 %v2238, %v2237
        %v2275 = vpack.c.b16 %v2240, %v2239
        %v2276 = vpack.c.b16 %v2242, %v2241
        %v2277 = vpack.c.b16 %v2244, %v2243
        %v2278 = vpack.c.b16 %v2246, %v2245
        %v2279 = vpack.c.b16 %v2248, %v2247
        %v2280 = vpack.c.b16 %v2250, %v2249
        %v2281 = vpack.c.b16 %v2252, %v2251
        %v2282 = vpack.c.b16 %v2254, %v2253
        %v2283 = vpack.c.b16 %v2256, %v2255
        %v2284 = vpack.c.b16 %v2258, %v2257
        %v2285 = vpack.c.b16 %v2260, %v2259
        %v2286 = vpack.c.b16 %v2262, %v2261
        %2311 = vmatpush.bf16.msra.mxu0 %v2270
        %2312 = vmatpush.bf16.msra.mxu0 %v2269
        %2313 = vmatpush.bf16.msra.mxu0 %v2268
        %2314 = vmatpush.bf16.msra.mxu0 %v2267
        %2315 = vmatpush.bf16.msra.mxu0 %v2266
        %2316 = vmatpush.bf16.msra.mxu0 %v2265
        %2317 = vmatpush.bf16.msra.mxu0 %v2264
        %2318 = vmatpush.bf16.msra.mxu0 %v2263
        %2319 = vmatmul.bf16.gmra.mxu0 %v1089
        %v2320 = vpop.f32.mrf.mxu0
        %v2321 = vadd.f32 0.0, %v2320
        %v2322 = vpop.f32.mrf.mxu0
        %v2323 = vadd.f32 0.0, %v2322
        %2324 = vmatmul.bf16.gmra.mxu0 %v1092
        %v2325 = vpop.f32.mrf.mxu0
        %v2326 = vadd.f32 0.0, %v2325
        %v2327 = vpop.f32.mrf.mxu0
        %v2328 = vadd.f32 0.0, %v2327
        %2329 = vmatmul.bf16.gmra.mxu0 %v1095
        %v2330 = vpop.f32.mrf.mxu0
        %v2331 = vadd.f32 0.0, %v2330
        %v2332 = vpop.f32.mrf.mxu0
        %v2333 = vadd.f32 0.0, %v2332
        %2334 = vmatmul.bf16.gmra.mxu0 %v1098
        %v2335 = vpop.f32.mrf.mxu0
        %v2336 = vadd.f32 0.0, %v2335
        %v2337 = vpop.f32.mrf.mxu0
        %v2338 = vadd.f32 0.0, %v2337
        %2339 = vmatmul.bf16.gmra.mxu0 %v1101
        %v2340 = vpop.f32.mrf.mxu0
        %v2341 = vadd.f32 0.0, %v2340
        %v2342 = vpop.f32.mrf.mxu0
        %v2343 = vadd.f32 0.0, %v2342
        %2344 = vmatmul.bf16.gmra.mxu0 %v1104
        %v2345 = vpop.f32.mrf.mxu0
        %v2346 = vadd.f32 0.0, %v2345
        %v2347 = vpop.f32.mrf.mxu0
        %v2348 = vadd.f32 0.0, %v2347
        %2349 = vmatmul.bf16.gmra.mxu0 %v1107
        %v2350 = vpop.f32.mrf.mxu0
        %v2351 = vadd.f32 0.0, %v2350
        %v2352 = vpop.f32.mrf.mxu0
        %v2353 = vadd.f32 0.0, %v2352
        %2354 = vmatmul.bf16.gmra.mxu0 %v1110
        %v2355 = vpop.f32.mrf.mxu0
        %v2356 = vadd.f32 0.0, %v2355
        %v2357 = vpop.f32.mrf.mxu0
        %v2358 = vadd.f32 0.0, %v2357
        %2359 = vmatmul.bf16.gmra.mxu0 %v1113
        %v2360 = vpop.f32.mrf.mxu0
        %v2361 = vadd.f32 0.0, %v2360
        %v2362 = vpop.f32.mrf.mxu0
        %v2363 = vadd.f32 0.0, %v2362
        %2364 = vmatmul.bf16.gmra.mxu0 %v1116
        %v2365 = vpop.f32.mrf.mxu0
        %v2366 = vadd.f32 0.0, %v2365
        %v2367 = vpop.f32.mrf.mxu0
        %v2368 = vadd.f32 0.0, %v2367
        %2369 = vmatmul.bf16.gmra.mxu0 %v1119
        %v2370 = vpop.f32.mrf.mxu0
        %v2371 = vadd.f32 0.0, %v2370
        %v2372 = vpop.f32.mrf.mxu0
        %v2373 = vadd.f32 0.0, %v2372
        %2374 = vmatmul.bf16.gmra.mxu0 %v1122
        %v2375 = vpop.f32.mrf.mxu0
        %v2376 = vadd.f32 0.0, %v2375
        %v2377 = vpop.f32.mrf.mxu0
        %v2378 = vadd.f32 0.0, %v2377
        %2379 = vmatmul.bf16.gmra.mxu0 %v1125
        %v2380 = vpop.f32.mrf.mxu0
        %v2381 = vadd.f32 0.0, %v2380
        %v2382 = vpop.f32.mrf.mxu0
        %v2383 = vadd.f32 0.0, %v2382
        %2384 = vmatmul.bf16.gmra.mxu0 %v1128
        %v2385 = vpop.f32.mrf.mxu0
        %v2386 = vadd.f32 0.0, %v2385
        %v2387 = vpop.f32.mrf.mxu0
        %v2388 = vadd.f32 0.0, %v2387
        %2389 = vmatmul.bf16.gmra.mxu0 %v1283
        %v2390 = vpop.f32.mrf.mxu0
        %v2391 = vadd.f32 0.0, %v2390
        %v2392 = vpop.f32.mrf.mxu0
        %v2393 = vadd.f32 0.0, %v2392
        %2394 = vmatmul.bf16.gmra.mxu0 %v2163
        %v2395 = vpop.f32.mrf.mxu0
        %v2396 = vadd.f32 0.0, %v2395
        %v2397 = vpop.f32.mrf.mxu0
        %v2398 = vadd.f32 0.0, %v2397
        %2399 = vdwg.mxu0
        %2400 = vmatpush.bf16.msra.mxu0 %v2278
        %2401 = vmatpush.bf16.msra.mxu0 %v2277
        %2402 = vmatpush.bf16.msra.mxu0 %v2276
        %2403 = vmatpush.bf16.msra.mxu0 %v2275
        %2404 = vmatpush.bf16.msra.mxu0 %v2274
        %2405 = vmatpush.bf16.msra.mxu0 %v2273
        %2406 = vmatpush.bf16.msra.mxu0 %v2272
        %2407 = vmatpush.bf16.msra.mxu0 %v2271
        %2408 = vmatmul.bf16.gmra.mxu0 %v1090
        %v2409 = vpop.f32.mrf.mxu0
        %v2410 = vadd.f32 %v2321, %v2409
        %v2411 = vpop.f32.mrf.mxu0
        %v2412 = vadd.f32 %v2323, %v2411
        %2413 = vmatmul.bf16.gmra.mxu0 %v1093
        %v2414 = vpop.f32.mrf.mxu0
        %v2415 = vadd.f32 %v2326, %v2414
        %v2416 = vpop.f32.mrf.mxu0
        %v2417 = vadd.f32 %v2328, %v2416
        %2418 = vmatmul.bf16.gmra.mxu0 %v1096
        %v2419 = vpop.f32.mrf.mxu0
        %v2420 = vadd.f32 %v2331, %v2419
        %v2421 = vpop.f32.mrf.mxu0
        %v2422 = vadd.f32 %v2333, %v2421
        %2423 = vmatmul.bf16.gmra.mxu0 %v1099
        %v2424 = vpop.f32.mrf.mxu0
        %v2425 = vadd.f32 %v2336, %v2424
        %v2426 = vpop.f32.mrf.mxu0
        %v2427 = vadd.f32 %v2338, %v2426
        %2428 = vmatmul.bf16.gmra.mxu0 %v1102
        %v2429 = vpop.f32.mrf.mxu0
        %v2430 = vadd.f32 %v2341, %v2429
        %v2431 = vpop.f32.mrf.mxu0
        %v2432 = vadd.f32 %v2343, %v2431
        %2433 = vmatmul.bf16.gmra.mxu0 %v1105
        %v2434 = vpop.f32.mrf.mxu0
        %v2435 = vadd.f32 %v2346, %v2434
        %v2436 = vpop.f32.mrf.mxu0
        %v2437 = vadd.f32 %v2348, %v2436
        %2438 = vmatmul.bf16.gmra.mxu0 %v1108
        %v2439 = vpop.f32.mrf.mxu0
        %v2440 = vadd.f32 %v2351, %v2439
        %v2441 = vpop.f32.mrf.mxu0
        %v2442 = vadd.f32 %v2353, %v2441
        %2443 = vmatmul.bf16.gmra.mxu0 %v1111
        %v2444 = vpop.f32.mrf.mxu0
        %v2445 = vadd.f32 %v2356, %v2444
        %v2446 = vpop.f32.mrf.mxu0
        %v2447 = vadd.f32 %v2358, %v2446
        %2448 = vmatmul.bf16.gmra.mxu0 %v1114
        %v2449 = vpop.f32.mrf.mxu0
        %v2450 = vadd.f32 %v2361, %v2449
        %v2451 = vpop.f32.mrf.mxu0
        %v2452 = vadd.f32 %v2363, %v2451
        %2453 = vmatmul.bf16.gmra.mxu0 %v1117
        %v2454 = vpop.f32.mrf.mxu0
        %v2455 = vadd.f32 %v2366, %v2454
        %v2456 = vpop.f32.mrf.mxu0
        %v2457 = vadd.f32 %v2368, %v2456
        %2458 = vmatmul.bf16.gmra.mxu0 %v1120
        %v2459 = vpop.f32.mrf.mxu0
        %v2460 = vadd.f32 %v2371, %v2459
        %v2461 = vpop.f32.mrf.mxu0
        %v2462 = vadd.f32 %v2373, %v2461
        %2463 = vmatmul.bf16.gmra.mxu0 %v1123
        %v2464 = vpop.f32.mrf.mxu0
        %v2465 = vadd.f32 %v2376, %v2464
        %v2466 = vpop.f32.mrf.mxu0
        %v2467 = vadd.f32 %v2378, %v2466
        %2468 = vmatmul.bf16.gmra.mxu0 %v1126
        %v2469 = vpop.f32.mrf.mxu0
        %v2470 = vadd.f32 %v2381, %v2469
        %v2471 = vpop.f32.mrf.mxu0
        %v2472 = vadd.f32 %v2383, %v2471
        %2473 = vmatmul.bf16.gmra.mxu0 %v1129
        %v2474 = vpop.f32.mrf.mxu0
        %v2475 = vadd.f32 %v2386, %v2474
        %v2476 = vpop.f32.mrf.mxu0
        %v2477 = vadd.f32 %v2388, %v2476
        %2478 = vmatmul.bf16.gmra.mxu0 %v1284
        %v2479 = vpop.f32.mrf.mxu0
        %v2480 = vadd.f32 %v2391, %v2479
        %v2481 = vpop.f32.mrf.mxu0
        %v2482 = vadd.f32 %v2393, %v2481
        %2483 = vmatmul.bf16.gmra.mxu0 %v2164
        %v2484 = vpop.f32.mrf.mxu0
        %v2485 = vadd.f32 %v2396, %v2484
        %v2486 = vpop.f32.mrf.mxu0
        %v2487 = vadd.f32 %v2398, %v2486
        %2488 = vdwg.mxu0
        %2489 = vmatpush.bf16.msra.mxu0 %v2286
        %2490 = vmatpush.bf16.msra.mxu0 %v2285
        %2491 = vmatpush.bf16.msra.mxu0 %v2284
        %2492 = vmatpush.bf16.msra.mxu0 %v2283
        %2493 = vmatpush.bf16.msra.mxu0 %v2282
        %2494 = vmatpush.bf16.msra.mxu0 %v2281
        %2495 = vmatpush.bf16.msra.mxu0 %v2280
        %2496 = vmatpush.bf16.msra.mxu0 %v2279
        %2497 = vmatmul.bf16.gmra.mxu0 %v1091
        %v2498 = vpop.f32.mrf.mxu0
        %v2499 = vadd.f32 %v2410, %v2498
        %v2500 = vpop.f32.mrf.mxu0
        %v2501 = vadd.f32 %v2412, %v2500
        %2502 = vmatmul.bf16.gmra.mxu0 %v1094
        %v2503 = vpop.f32.mrf.mxu0
        %v2504 = vadd.f32 %v2415, %v2503
        %v2505 = vpop.f32.mrf.mxu0
        %v2506 = vadd.f32 %v2417, %v2505
        %2507 = vmatmul.bf16.gmra.mxu0 %v1097
        %v2508 = vpop.f32.mrf.mxu0
        %v2509 = vadd.f32 %v2420, %v2508
        %v2510 = vpop.f32.mrf.mxu0
        %v2511 = vadd.f32 %v2422, %v2510
        %2512 = vmatmul.bf16.gmra.mxu0 %v1100
        %v2513 = vpop.f32.mrf.mxu0
        %v2514 = vadd.f32 %v2425, %v2513
        %v2515 = vpop.f32.mrf.mxu0
        %v2516 = vadd.f32 %v2427, %v2515
        %2517 = vmatmul.bf16.gmra.mxu0 %v1103
        %v2518 = vpop.f32.mrf.mxu0
        %v2519 = vadd.f32 %v2430, %v2518
        %v2520 = vpop.f32.mrf.mxu0
        %v2521 = vadd.f32 %v2432, %v2520
        %2522 = vmatmul.bf16.gmra.mxu0 %v1106
        %v2523 = vpop.f32.mrf.mxu0
        %v2524 = vadd.f32 %v2435, %v2523
        %v2525 = vpop.f32.mrf.mxu0
        %v2526 = vadd.f32 %v2437, %v2525
        %2527 = vmatmul.bf16.gmra.mxu0 %v1109
        %v2528 = vpop.f32.mrf.mxu0
        %v2529 = vadd.f32 %v2440, %v2528
        %v2530 = vpop.f32.mrf.mxu0
        %v2531 = vadd.f32 %v2442, %v2530
        %2532 = vmatmul.bf16.gmra.mxu0 %v1112
        %v2533 = vpop.f32.mrf.mxu0
        %v2534 = vadd.f32 %v2445, %v2533
        %v2535 = vpop.f32.mrf.mxu0
        %v2536 = vadd.f32 %v2447, %v2535
        %2537 = vmatmul.bf16.gmra.mxu0 %v1115
        %v2538 = vpop.f32.mrf.mxu0
        %v2539 = vadd.f32 %v2450, %v2538
        %v2540 = vpop.f32.mrf.mxu0
        %v2541 = vadd.f32 %v2452, %v2540
        %2542 = vmatmul.bf16.gmra.mxu0 %v1118
        %v2543 = vpop.f32.mrf.mxu0
        %v2544 = vadd.f32 %v2455, %v2543
        %v2545 = vpop.f32.mrf.mxu0
        %v2546 = vadd.f32 %v2457, %v2545
        %2547 = vmatmul.bf16.gmra.mxu0 %v1121
        %v2548 = vpop.f32.mrf.mxu0
        %v2549 = vadd.f32 %v2460, %v2548
        %v2550 = vpop.f32.mrf.mxu0
        %v2551 = vadd.f32 %v2462, %v2550
        %2552 = vmatmul.bf16.gmra.mxu0 %v1124
        %v2553 = vpop.f32.mrf.mxu0
        %v2554 = vadd.f32 %v2465, %v2553
        %v2555 = vpop.f32.mrf.mxu0
        %v2556 = vadd.f32 %v2467, %v2555
        %2557 = vmatmul.bf16.gmra.mxu0 %v1127
        %v2558 = vpop.f32.mrf.mxu0
        %v2559 = vadd.f32 %v2470, %v2558
        %v2560 = vpop.f32.mrf.mxu0
        %v2561 = vadd.f32 %v2472, %v2560
        %2562 = vmatmul.bf16.gmra.mxu0 %v1130
        %v2563 = vpop.f32.mrf.mxu0
        %v2564 = vadd.f32 %v2475, %v2563
        %v2565 = vpop.f32.mrf.mxu0
        %v2566 = vadd.f32 %v2477, %v2565
        %2567 = vmatmul.bf16.gmra.mxu0 %v1285
        %v2568 = vpop.f32.mrf.mxu0
        %v2569 = vadd.f32 %v2480, %v2568
        %v2570 = vpop.f32.mrf.mxu0
        %v2571 = vadd.f32 %v2482, %v2570
        %2572 = vmatmul.bf16.gmra.mxu0 %v2163
        %v2573 = vpop.f32.mrf.mxu0
        %v2574 = vadd.f32 %v2485, %v2573
        %v2575 = vpop.f32.mrf.mxu0
        %v2576 = vadd.f32 %v2487, %v2575
        %2577 = vdwg.mxu0
        %v2578 = vadd.f32 %v2032, %v2499
        %v2579 = vadd.f32 %v2034, %v2501
        %v2580 = vadd.f32 %v2037, %v2504
        %v2581 = vadd.f32 %v2039, %v2506
        %v2582 = vadd.f32 %v2042, %v2509
        %v2583 = vadd.f32 %v2044, %v2511
        %v2584 = vadd.f32 %v2047, %v2514
        %v2585 = vadd.f32 %v2049, %v2516
        %v2586 = vadd.f32 %v2052, %v2519
        %v2587 = vadd.f32 %v2054, %v2521
        %v2588 = vadd.f32 %v2057, %v2524
        %v2589 = vadd.f32 %v2059, %v2526
        %v2590 = vadd.f32 %v2062, %v2529
        %v2591 = vadd.f32 %v2064, %v2531
        %v2592 = vadd.f32 %v2067, %v2534
        %v2593 = vadd.f32 %v2069, %v2536
        %v2594 = vadd.f32 %v2072, %v2539
        %v2595 = vadd.f32 %v2074, %v2541
        %v2596 = vadd.f32 %v2077, %v2544
        %v2597 = vadd.f32 %v2079, %v2546
        %v2598 = vadd.f32 %v2082, %v2549
        %v2599 = vadd.f32 %v2084, %v2551
        %v2600 = vadd.f32 %v2087, %v2554
        %v2601 = vadd.f32 %v2089, %v2556
        %v2602 = vadd.f32 %v2092, %v2559
        %v2603 = vadd.f32 %v2094, %v2561
        %v2604 = vadd.f32 %v2097, %v2564
        %v2605 = vadd.f32 %v2099, %v2566
        %v2606 = vadd.f32 %v2102, %v2569
        %v2607 = vadd.f32 %v2104, %v2571
        %v2608 = vadd.f32 %v2107, %v2574
        %v2609 = vadd.f32 %v2109, %v2576
        %v2610 = vld [vmem:[%s4] sm:$0x1]
        %v2612 = vperm.slane %v2610, 0
        %v2614 = vadd.f32 %v2578, %v2612
        %v2615 = vadd.f32 %v2579, %v2612
        %v2616 = vadd.f32 %v2580, %v2612
        %v2617 = vadd.f32 %v2581, %v2612
        %v2618 = vadd.f32 %v2582, %v2612
        %v2619 = vadd.f32 %v2583, %v2612
        %v2620 = vadd.f32 %v2584, %v2612
        %v2621 = vadd.f32 %v2585, %v2612
        %v2622 = vadd.f32 %v2586, %v2612
        %v2623 = vadd.f32 %v2587, %v2612
        %v2624 = vadd.f32 %v2588, %v2612
        %v2625 = vadd.f32 %v2589, %v2612
        %v2626 = vadd.f32 %v2590, %v2612
        %v2627 = vadd.f32 %v2591, %v2612
        %v2628 = vadd.f32 %v2592, %v2612
        %v2629 = vadd.f32 %v2593, %v2612
        %v2630 = vadd.f32 %v2594, %v2612
        %v2631 = vadd.f32 %v2595, %v2612
        %v2632 = vadd.f32 %v2596, %v2612
        %v2633 = vadd.f32 %v2597, %v2612
        %v2634 = vadd.f32 %v2598, %v2612
        %v2635 = vadd.f32 %v2599, %v2612
        %v2636 = vadd.f32 %v2600, %v2612
        %v2637 = vadd.f32 %v2601, %v2612
        %v2638 = vadd.f32 %v2602, %v2612
        %v2639 = vadd.f32 %v2603, %v2612
        %v2640 = vadd.f32 %v2604, %v2612
        %v2641 = vadd.f32 %v2605, %v2612
        %v2642 = vadd.f32 %v2606, %v2612
        %v2643 = vadd.f32 %v2607, %v2612
        %v2644 = vadd.f32 %v2608, %v2612
        %v2645 = vadd.f32 %v2609, %v2612
        %v2646 = vmax.f32 %v2614, 0.0
        %v2647 = vmax.f32 %v2615, 0.0
        %v2648 = vmax.f32 %v2616, 0.0
        %v2649 = vmax.f32 %v2617, 0.0
        %v2650 = vmax.f32 %v2618, 0.0
        %v2651 = vmax.f32 %v2619, 0.0
        %v2652 = vmax.f32 %v2620, 0.0
        %v2653 = vmax.f32 %v2621, 0.0
        %v2654 = vmax.f32 %v2622, 0.0
        %v2655 = vmax.f32 %v2623, 0.0
        %v2656 = vmax.f32 %v2624, 0.0
        %v2657 = vmax.f32 %v2625, 0.0
        %v2658 = vmax.f32 %v2626, 0.0
        %v2659 = vmax.f32 %v2627, 0.0
        %v2660 = vmax.f32 %v2628, 0.0
        %v2661 = vmax.f32 %v2629, 0.0
        %v2662 = vmax.f32 %v2630, 0.0
        %v2663 = vmax.f32 %v2631, 0.0
        %v2664 = vmax.f32 %v2632, 0.0
        %v2665 = vmax.f32 %v2633, 0.0
        %v2666 = vmax.f32 %v2634, 0.0
        %v2667 = vmax.f32 %v2635, 0.0
        %v2668 = vmax.f32 %v2636, 0.0
        %v2669 = vmax.f32 %v2637, 0.0
        %v2670 = vmax.f32 %v2638, 0.0
        %v2671 = vmax.f32 %v2639, 0.0
        %v2672 = vmax.f32 %v2640, 0.0
        %v2673 = vmax.f32 %v2641, 0.0
        %v2674 = vmax.f32 %v2642, 0.0
        %v2675 = vmax.f32 %v2643, 0.0
        %v2676 = vmax.f32 %v2644, 0.0
        %v2677 = vmax.f32 %v2645, 0.0
        %v2678 = vpack.c.bf16 %v2647, %v2646
        %v2679 = vpack.c.bf16 %v2649, %v2648
        %v2680 = vpack.c.bf16 %v2651, %v2650
        %v2681 = vpack.c.bf16 %v2653, %v2652
        %v2682 = vpack.c.bf16 %v2655, %v2654
        %v2683 = vpack.c.bf16 %v2657, %v2656
        %v2684 = vpack.c.bf16 %v2659, %v2658
        %v2685 = vpack.c.bf16 %v2661, %v2660
        %v2686 = vpack.c.bf16 %v2663, %v2662
        %v2687 = vpack.c.bf16 %v2665, %v2664
        %v2688 = vpack.c.bf16 %v2667, %v2666
        %v2689 = vpack.c.bf16 %v2669, %v2668
        %v2690 = vpack.c.bf16 %v2671, %v2670
        %v2691 = vpack.c.bf16 %v2673, %v2672
        %v2692 = vpack.c.bf16 %v2675, %v2674
        %v2693 = vpack.c.bf16 %v2677, %v2676
        %v2694 = vld [vmem:[%s5] sm:$0xf]
        %v2695 = vld [vmem:[%s5 + $0x4] sm:$0xf]
        %v2696 = vld [vmem:[%s5 + $0x8] sm:$0xf]
        %v2697 = vld [vmem:[%s5 + $0xc] sm:$0xf]
        %v2698 = vld [vmem:[%s5 + $0x10] sm:$0xf]
        %v2699 = vld [vmem:[%s5 + $0x14] sm:$0xf]
        %v2700 = vld [vmem:[%s5 + $0x18] sm:$0xf]
        %v2701 = vld [vmem:[%s5 + $0x1c] sm:$0xf]
        %v2702 = vld [vmem:[%s5 + $0x20] sm:$0xf]
        %v2703 = vld [vmem:[%s5 + $0x24] sm:$0xf]
        %v2704 = vld [vmem:[%s5 + $0x28] sm:$0xf]
        %v2705 = vld [vmem:[%s5 + $0x2c] sm:$0xf]
        %v2706 = vld [vmem:[%s5 + $0x30] sm:$0xf]
        %v2707 = vld [vmem:[%s5 + $0x34] sm:$0xf]
        %v2708 = vld [vmem:[%s5 + $0x38] sm:$0xf]
        %v2709 = vld [vmem:[%s5 + $0x3c] sm:$0xf]
        %v2710 = vld [vmem:[%s6] sm:$0x1]
        %v2712 = vperm.slane %v2710, 0
        %v2730 = vunpack.c.l.b16 %v2694
        %v2731 = vunpack.c.l.b16 %v2695
        %v2732 = vunpack.c.l.b16 %v2696
        %v2733 = vunpack.c.l.b16 %v2697
        %v2734 = vunpack.c.l.b16 %v2698
        %v2735 = vunpack.c.l.b16 %v2699
        %v2736 = vunpack.c.l.b16 %v2700
        %v2737 = vunpack.c.l.b16 %v2701
        %v2738 = vunpack.c.l.b16 %v2702
        %v2739 = vunpack.c.l.b16 %v2703
        %v2740 = vunpack.c.l.b16 %v2704
        %v2741 = vunpack.c.l.b16 %v2705
        %v2742 = vunpack.c.l.b16 %v2706
        %v2743 = vunpack.c.l.b16 %v2707
        %v2744 = vunpack.c.l.b16 %v2708
        %v2745 = vunpack.c.l.b16 %v2709
        %v2746 = vpack.c.b16 %v2731, %v2730
        %v2747 = vpack.c.b16 %v2733, %v2732
        %v2748 = vpack.c.b16 %v2735, %v2734
        %v2749 = vpack.c.b16 %v2737, %v2736
        %v2750 = vpack.c.b16 %v2739, %v2738
        %v2751 = vpack.c.b16 %v2741, %v2740
        %v2752 = vpack.c.b16 %v2743, %v2742
        %v2753 = vpack.c.b16 %v2745, %v2744
        %2762 = vmatpush.bf16.msra.mxu0 %v2753
        %2763 = vmatpush.bf16.msra.mxu0 %v2752
        %2764 = vmatpush.bf16.msra.mxu0 %v2751
        %2765 = vmatpush.bf16.msra.mxu0 %v2750
        %2766 = vmatpush.bf16.msra.mxu0 %v2749
        %2767 = vmatpush.bf16.msra.mxu0 %v2748
        %2768 = vmatpush.bf16.msra.mxu0 %v2747
        %2769 = vmatpush.bf16.msra.mxu0 %v2746
        %2770 = vmatmul.bf16.gmra.mxu0 %v2678
        %v2771 = vpop.f32.mrf.mxu0
        %v2772 = vadd.f32 %v2712, %v2771
        %v2773 = vpop.f32.mrf.mxu0
        %v2774 = vadd.f32 %v2712, %v2773
        %2775 = vmatmul.bf16.gmra.mxu0 %v2679
        %v2776 = vpop.f32.mrf.mxu0
        %v2777 = vadd.f32 %v2712, %v2776
        %v2778 = vpop.f32.mrf.mxu0
        %v2779 = vadd.f32 %v2712, %v2778
        %2780 = vmatmul.bf16.gmra.mxu0 %v2680
        %v2781 = vpop.f32.mrf.mxu0
        %v2782 = vadd.f32 %v2712, %v2781
        %v2783 = vpop.f32.mrf.mxu0
        %v2784 = vadd.f32 %v2712, %v2783
        %2785 = vmatmul.bf16.gmra.mxu0 %v2681
        %v2786 = vpop.f32.mrf.mxu0
        %v2787 = vadd.f32 %v2712, %v2786
        %v2788 = vpop.f32.mrf.mxu0
        %v2789 = vadd.f32 %v2712, %v2788
        %2790 = vmatmul.bf16.gmra.mxu0 %v2682
        %v2791 = vpop.f32.mrf.mxu0
        %v2792 = vadd.f32 %v2712, %v2791
        %v2793 = vpop.f32.mrf.mxu0
        %v2794 = vadd.f32 %v2712, %v2793
        %2795 = vmatmul.bf16.gmra.mxu0 %v2683
        %v2796 = vpop.f32.mrf.mxu0
        %v2797 = vadd.f32 %v2712, %v2796
        %v2798 = vpop.f32.mrf.mxu0
        %v2799 = vadd.f32 %v2712, %v2798
        %2800 = vmatmul.bf16.gmra.mxu0 %v2684
        %v2801 = vpop.f32.mrf.mxu0
        %v2802 = vadd.f32 %v2712, %v2801
        %v2803 = vpop.f32.mrf.mxu0
        %v2804 = vadd.f32 %v2712, %v2803
        %2805 = vmatmul.bf16.gmra.mxu0 %v2685
        %v2806 = vpop.f32.mrf.mxu0
        %v2807 = vadd.f32 %v2712, %v2806
        %v2808 = vpop.f32.mrf.mxu0
        %v2809 = vadd.f32 %v2712, %v2808
        %2810 = vmatmul.bf16.gmra.mxu0 %v2686
        %v2811 = vpop.f32.mrf.mxu0
        %v2812 = vadd.f32 %v2712, %v2811
        %v2813 = vpop.f32.mrf.mxu0
        %v2814 = vadd.f32 %v2712, %v2813
        %2815 = vmatmul.bf16.gmra.mxu0 %v2687
        %v2816 = vpop.f32.mrf.mxu0
        %v2817 = vadd.f32 %v2712, %v2816
        %v2818 = vpop.f32.mrf.mxu0
        %v2819 = vadd.f32 %v2712, %v2818
        %2820 = vmatmul.bf16.gmra.mxu0 %v2688
        %v2821 = vpop.f32.mrf.mxu0
        %v2822 = vadd.f32 %v2712, %v2821
        %v2823 = vpop.f32.mrf.mxu0
        %v2824 = vadd.f32 %v2712, %v2823
        %2825 = vmatmul.bf16.gmra.mxu0 %v2689
        %v2826 = vpop.f32.mrf.mxu0
        %v2827 = vadd.f32 %v2712, %v2826
        %v2828 = vpop.f32.mrf.mxu0
        %v2829 = vadd.f32 %v2712, %v2828
        %2830 = vmatmul.bf16.gmra.mxu0 %v2690
        %v2831 = vpop.f32.mrf.mxu0
        %v2832 = vadd.f32 %v2712, %v2831
        %v2833 = vpop.f32.mrf.mxu0
        %v2834 = vadd.f32 %v2712, %v2833
        %2835 = vmatmul.bf16.gmra.mxu0 %v2691
        %v2836 = vpop.f32.mrf.mxu0
        %v2837 = vadd.f32 %v2712, %v2836
        %v2838 = vpop.f32.mrf.mxu0
        %v2839 = vadd.f32 %v2712, %v2838
        %2840 = vmatmul.bf16.gmra.mxu0 %v2692
        %v2841 = vpop.f32.mrf.mxu0
        %v2842 = vadd.f32 %v2712, %v2841
        %v2843 = vpop.f32.mrf.mxu0
        %v2844 = vadd.f32 %v2712, %v2843
        %2845 = vmatmul.bf16.gmra.mxu0 %v2693
        %v2846 = vpop.f32.mrf.mxu0
        %v2847 = vadd.f32 %v2712, %v2846
        %v2848 = vpop.f32.mrf.mxu0
        %v2849 = vadd.f32 %v2712, %v2848
        %2850 = vdwg.mxu0
        %v2851 = vunpack.c.l.bf16 %v278
        %v2852 = vunpack.c.l.bf16 %v279
        %v2853 = vunpack.c.l.bf16 %v280
        %v2854 = vunpack.c.l.bf16 %v281
        %v2855 = vunpack.c.l.bf16 %v282
        %v2856 = vunpack.c.l.bf16 %v283
        %v2857 = vunpack.c.l.bf16 %v284
        %v2858 = vunpack.c.l.bf16 %v285
        %v2859 = vunpack.c.l.bf16 %v286
        %v2860 = vunpack.c.l.bf16 %v287
        %v2861 = vunpack.c.l.bf16 %v288
        %v2862 = vunpack.c.l.bf16 %v289
        %v2863 = vunpack.c.l.bf16 %v290
        %v2864 = vunpack.c.l.bf16 %v291
        %v2865 = vunpack.c.l.bf16 %v292
        %v2866 = vunpack.c.l.bf16 %v293
        %v2867 = vunpack.c.l.bf16 %v294
        %v2868 = vunpack.c.l.bf16 %v295
        %v2869 = vunpack.c.l.bf16 %v296
        %v2870 = vunpack.c.l.bf16 %v297
        %v2871 = vunpack.c.l.bf16 %v298
        %v2872 = vunpack.c.l.bf16 %v299
        %v2873 = vunpack.c.l.bf16 %v300
        %v2874 = vunpack.c.l.bf16 %v301
        %v2875 = vunpack.c.l.bf16 %v302
        %v2876 = vunpack.c.l.bf16 %v303
        %v2877 = vunpack.c.l.bf16 %v304
        %v2878 = vunpack.c.l.bf16 %v305
        %v2879 = vunpack.c.l.bf16 %v306
        %v2880 = vunpack.c.l.bf16 %v307
        %v2881 = vunpack.c.l.bf16 %v308
        %v2882 = vunpack.c.l.bf16 %v309
        %v2883 = vadd.f32 %v2772, %v2851
        %v2884 = vadd.f32 %v2774, %v2852
        %v2885 = vadd.f32 %v2777, %v2853
        %v2886 = vadd.f32 %v2779, %v2854
        %v2887 = vadd.f32 %v2782, %v2855
        %v2888 = vadd.f32 %v2784, %v2856
        %v2889 = vadd.f32 %v2787, %v2857
        %v2890 = vadd.f32 %v2789, %v2858
        %v2891 = vadd.f32 %v2792, %v2859
        %v2892 = vadd.f32 %v2794, %v2860
        %v2893 = vadd.f32 %v2797, %v2861
        %v2894 = vadd.f32 %v2799, %v2862
        %v2895 = vadd.f32 %v2802, %v2863
        %v2896 = vadd.f32 %v2804, %v2864
        %v2897 = vadd.f32 %v2807, %v2865
        %v2898 = vadd.f32 %v2809, %v2866
        %v2899 = vadd.f32 %v2812, %v2867
        %v2900 = vadd.f32 %v2814, %v2868
        %v2901 = vadd.f32 %v2817, %v2869
        %v2902 = vadd.f32 %v2819, %v2870
        %v2903 = vadd.f32 %v2822, %v2871
        %v2904 = vadd.f32 %v2824, %v2872
        %v2905 = vadd.f32 %v2827, %v2873
        %v2906 = vadd.f32 %v2829, %v2874
        %v2907 = vadd.f32 %v2832, %v2875
        %v2908 = vadd.f32 %v2834, %v2876
        %v2909 = vadd.f32 %v2837, %v2877
        %v2910 = vadd.f32 %v2839, %v2878
        %v2911 = vadd.f32 %v2842, %v2879
        %v2912 = vadd.f32 %v2844, %v2880
        %v2913 = vadd.f32 %v2847, %v2881
        %v2914 = vadd.f32 %v2849, %v2882
        %v2915 = vmax.f32 %v2883, 0.0
        %v2916 = vmax.f32 %v2884, 0.0
        %v2917 = vmax.f32 %v2885, 0.0
        %v2918 = vmax.f32 %v2886, 0.0
        %v2919 = vmax.f32 %v2887, 0.0
        %v2920 = vmax.f32 %v2888, 0.0
        %v2921 = vmax.f32 %v2889, 0.0
        %v2922 = vmax.f32 %v2890, 0.0
        %v2923 = vmax.f32 %v2891, 0.0
        %v2924 = vmax.f32 %v2892, 0.0
        %v2925 = vmax.f32 %v2893, 0.0
        %v2926 = vmax.f32 %v2894, 0.0
        %v2927 = vmax.f32 %v2895, 0.0
        %v2928 = vmax.f32 %v2896, 0.0
        %v2929 = vmax.f32 %v2897, 0.0
        %v2930 = vmax.f32 %v2898, 0.0
        %v2931 = vmax.f32 %v2899, 0.0
        %v2932 = vmax.f32 %v2900, 0.0
        %v2933 = vmax.f32 %v2901, 0.0
        %v2934 = vmax.f32 %v2902, 0.0
        %v2935 = vmax.f32 %v2903, 0.0
        %v2936 = vmax.f32 %v2904, 0.0
        %v2937 = vmax.f32 %v2905, 0.0
        %v2938 = vmax.f32 %v2906, 0.0
        %v2939 = vmax.f32 %v2907, 0.0
        %v2940 = vmax.f32 %v2908, 0.0
        %v2941 = vmax.f32 %v2909, 0.0
        %v2942 = vmax.f32 %v2910, 0.0
        %v2943 = vmax.f32 %v2911, 0.0
        %v2944 = vmax.f32 %v2912, 0.0
        %v2945 = vmax.f32 %v2913, 0.0
        %v2946 = vmax.f32 %v2914, 0.0
        %2947 = vst [vmem:[%s271] sm:$0xff] %v2915
        %2948 = vst [vmem:[%s271 + $0x8] sm:$0xff] %v2916
        %2949 = vst [vmem:[%s271 + $0x10] sm:$0xff] %v2917
        %2950 = vst [vmem:[%s271 + $0x18] sm:$0xff] %v2918
        %2951 = vst [vmem:[%s271 + $0x20] sm:$0xff] %v2919
        %2952 = vst [vmem:[%s271 + $0x28] sm:$0xff] %v2920
        %2953 = vst [vmem:[%s271 + $0x30] sm:$0xff] %v2921
        %2954 = vst [vmem:[%s271 + $0x38] sm:$0xff] %v2922
        %2955 = vst [vmem:[%s271 + $0x40] sm:$0xff] %v2923
        %2956 = vst [vmem:[%s271 + $0x48] sm:$0xff] %v2924
        %2957 = vst [vmem:[%s271 + $0x50] sm:$0xff] %v2925
        %2958 = vst [vmem:[%s271 + $0x58] sm:$0xff] %v2926
        %2959 = vst [vmem:[%s271 + $0x60] sm:$0xff] %v2927
        %2960 = vst [vmem:[%s271 + $0x68] sm:$0xff] %v2928
        %2961 = vst [vmem:[%s271 + $0x70] sm:$0xff] %v2929
        %2962 = vst [vmem:[%s271 + $0x78] sm:$0xff] %v2930
        %2963 = vst [vmem:[%s271 + $0x80] sm:$0xff] %v2931
        %2964 = vst [vmem:[%s271 + $0x88] sm:$0xff] %v2932
        %2965 = vst [vmem:[%s271 + $0x90] sm:$0xff] %v2933
        %2966 = vst [vmem:[%s271 + $0x98] sm:$0xff] %v2934
        %2967 = vst [vmem:[%s271 + $0xa0] sm:$0xff] %v2935
        %2968 = vst [vmem:[%s271 + $0xa8] sm:$0xff] %v2936
        %2969 = vst [vmem:[%s271 + $0xb0] sm:$0xff] %v2937
        %2970 = vst [vmem:[%s271 + $0xb8] sm:$0xff] %v2938
        %2971 = vst [vmem:[%s271 + $0xc0] sm:$0xff] %v2939
        %2972 = vst [vmem:[%s271 + $0xc8] sm:$0xff] %v2940
        %2973 = vst [vmem:[%s271 + $0xd0] sm:$0xff] %v2941
        %2974 = vst [vmem:[%s271 + $0xd8] sm:$0xff] %v2942
        %2975 = vst [vmem:[%s271 + $0xe0] sm:$0xff] %v2943
        %2976 = vst [vmem:[%s271 + $0xe8] sm:$0xff] %v2944
        %2977 = vst [vmem:[%s271 + $0xf0] sm:$0xff] %v2945
        %2978 = vst [vmem:[%s271 + $0xf8] sm:$0xff] %v2946
        %s2979 = sand.u32 %s181, 1
        %s2980 = scalar_lea.sflag [#allocation3], %s2979
        %s2981 = sand.u32 %s181, 1
        %s2982 = smul.addr %s2981, 256
        %s2983 = scalar_lea.vmem [#allocation2], %s2982
        // Predicated region
        $region49: #{bottleneck_forward.1} parent=47 // pred_check
          %p2984 = pneg %p191
        $region50: #{bottleneck_forward.1} parent=47 // pred_check_branch
          %2986 = sbr.rel (%p2984) target = $region52
        $region51: #{bottleneck_forward.1} parent=47 // pred_region
          %2988 = vsyncadd %s2980, 0
          %s2989 = smul.addr %s21, 32
          %s2990 = smul.addr %s2989, 8
          %s2991 = scalar_lea.hbm %s7, %s2990
          %s2992 = sshll.u32 %s2983, 4
          %s2993 = int_to_ptr.vmem [resolvable:$true] %s2992
          %s2994 = sshll.u32 %s2991, 4
          %s2995 = int_to_ptr.hbm [resolvable:$true] %s2994
          %3000 = dma.vmem_to_hbm [thread:$0]  %s2993, 4096, %s2995, %s2980, 128, 128, 8
        $region52: #{bottleneck_forward.1} parent=47 // pred_fallthru
          _
      $region48: #{bottleneck_forward.1} parent=5 // pred_fallthru
        _
      %p3001 = scmp.le.s32.totalorder 2, %s16
      // Predicated region
      $region53: #{bottleneck_forward.1} parent=5 // pred_check
        %p3002 = pneg %p3001
      $region54: #{bottleneck_forward.1} parent=5 // pred_check_branch
        %3004 = sbr.rel (%p3002) target = $region56
      $region55: #{bottleneck_forward.1} parent=5 // pred_region
        %s3005 = ssub.s32 %s16, 2
        // Predicated region
        $region57: #{bottleneck_forward.1} parent=55 // pred_check
          %p3006 = pneg %p197
        $region58: #{bottleneck_forward.1} parent=55 // pred_check_branch
          %3008 = sbr.rel (%p3006) target = $region60
        $region59: #{bottleneck_forward.1} parent=55 // pred_region
          %s3009 = sand.u32 %s182, 1
          %s3010 = scalar_lea.sflag [#allocation3], %s3009
          %s3011 = sand.u32 %s182, 1
          %s3012 = smul.addr %s3011, 256
          %s3013 = scalar_lea.vmem [#allocation2], %s3012
          %3015 = dma.done %s3010, 4096
        $region60: #{bottleneck_forward.1} parent=55 // pred_fallthru
          _
      $region56: #{bottleneck_forward.1} parent=5 // pred_fallthru
        _
    $region6: #{bottleneck_forward.1} parent=1 // loop_footer
      %s20 = sadd.s32 1, %s16
    $region7: #{bottleneck_forward.1} parent=1 // loop_footer_branch
      %15 = sbr.rel target = $region3
    $region8: #{bottleneck_forward.1} parent=1 // loop_exit
      _
    %3016 = vsyncpa [#allocation3], 1
    %s3017 = scalar_lea.sflag [#allocation3], 1
    %3018 = vsyncpa %s3017, 1

</llo_original>
